<compile_context>
chip_gen: v6e
topology: v6e:2x2x1
jax: 0.10.0
libtpu: 0.0.40
codegen_flags: <defaults>
</compile_context>

<pallas_src>
import functools

import jax
import jax.numpy as jnp
from jax.experimental import pallas as pl
from jax.experimental.pallas import tpu as pltpu

N_FEATURES = 2          # real input features
N_OUT = 2               # real output features
HIDDEN = 256


def default_act_dtype():
    """bf16 activations on chips with a bf16 VALU (v6e/v7x); f32 otherwise."""
    try:
        kind = jax.devices()[0].device_kind.lower()
    except Exception:
        return jnp.float32
    for old in ("v2", "v3", "v4", "v5"):
        if old in kind:
            return jnp.float32
    if "v6" in kind or "v7" in kind or "tpu" in kind:
        return jnp.bfloat16
    return jnp.float32


def _device_caps():
    """Per-generation batch-tile ceiling and scoped-VMEM limit."""
    try:
        kind = jax.devices()[0].device_kind.lower()
    except Exception:
        kind = ""
    if "v7" in kind:
        # 64 MiB physical VMEM: moderate tile, leave headroom for the compiler.
        return {"tb_cap": 4096, "vmem_limit": 48 << 20}
    if "v6" in kind:
        # 128 MiB physical: big tiles hide the ~0.35 us/step grid overhead.
        return {"tb_cap": 8192, "vmem_limit": 96 << 20}
    # v5e (16 MiB scoped default, 128 MiB physical) & unknown.
    return {"tb_cap": 4096, "vmem_limit": 64 << 20}


def _round_up(n, m):
    return ((n + m - 1) // m) * m


def _generator_kernel(x_ref, w0_ref, b0_ref, w1_ref, b1_ref, w2t_ref, b2_ref, o_ref):
    """One batch tile of the full forward pass.

    x_ref  : [TB, 2]     f32            (streamed per grid step)
    w0_ref : [2, 256]    act_dtype      (resident)
    b0_ref : [1, 256]    act_dtype      (resident)
    w1_ref : [256, 256]  bf16           (resident; MXU operand)
    b1_ref : [1, 256]    act_dtype      (resident)
    w2t_ref: [2, 256]    act_dtype      (resident; w2 columns stored as rows)
    b2_ref : [1, 2]      f32            (resident)
    o_ref  : [TB, 2]     f32
    """
    act_dt = w0_ref.dtype

    # ---- hidden0: Linear(2, 256) + LeakyReLU(0.2) --------------------------
    # Two VPU rank-1 updates instead of a 98%-zero padded MXU matmul.
    # NOTE: relies on a [TB,1] -> [TB,256] lane-broadcast; if a bundle dump
    # shows this lowering poorly, switch layer 0 to a K=8-padded bf16 MXU
    # matmul (the MXU has slack now that the output layer is off it).
    x = x_ref[...].astype(act_dt)                       # [TB, 2] (tiny cast)
    w0 = w0_ref[...]
    h0 = x[:, 0:1] * w0[0:1, :] + x[:, 1:2] * w0[1:2, :] + b0_ref[...]
    h0 = jnp.maximum(h0, 0.2 * h0)                      # LeakyReLU: mul + max

    # ---- hidden1: Linear(256, 256) + LeakyReLU(0.2) ------------------------
    # bf16 MXU matmul with f32 accumulation; bias add + activation in act_dt
    # (bf16 on v6e/v7x halves the VALU work; f32 on v5e).
    h1 = jnp.dot(h0.astype(jnp.bfloat16), w1_ref[...],
                 preferred_element_type=jnp.float32)    # [TB, 256] f32 acc
    h1 = h1.astype(act_dt) + b1_ref[...]
    h1 = jnp.maximum(h1, 0.2 * h1)

    # ---- out: Linear(256, 2) + Tanh -----------------------------------------
    # Only 2 real output columns: two lane reductions (VALU mul + XLU reduce,
    # f32 accumulation) instead of a padded [TB,256]x[256,128] MXU matmul.
    w2t = w2t_ref[...]                                   # [2, 256]
    p0 = (h1 * w2t[0:1, :]).astype(jnp.float32)
    p1 = (h1 * w2t[1:2, :]).astype(jnp.float32)
    y0 = jnp.sum(p0, axis=-1, keepdims=True) + b2_ref[:, 0:1]   # [TB, 1]
    y1 = jnp.sum(p1, axis=-1, keepdims=True) + b2_ref[:, 1:2]   # [TB, 1]
    o_ref[:, 0:1] = jnp.tanh(y0)
    o_ref[:, 1:2] = jnp.tanh(y1)


@functools.partial(jax.jit, static_argnames=("tb",))
def generator_forward(x, params, tb=None):
    """x: [B, N_FEATURES] float32  ->  [B, N_OUT] float32."""
    w0, b0, w1, b1, w2t, b2 = params
    B = x.shape[0]
    caps = _device_caps()

    # Batch tile: per-generation ceiling, shrink for small batches (multiple of
    # 8 sublanes), and keep >= 2 grid steps when possible so v7x's two
    # TensorCores both get work via the "parallel" batch axis.
    tb = caps["tb_cap"] if tb is None else int(min(tb, caps["tb_cap"]))
    tb = min(tb, _round_up(B, 8))
    if B >= 16:
        tb = min(tb, _round_up(pl.cdiv(B, 2), 8))
    tb = max(8, tb)

    b_pad = pl.cdiv(B, tb) * tb
    if b_pad != B:
        # Padded rows produce finite garbage that is sliced off below.
        x = jnp.pad(x, ((0, b_pad - B), (0, 0)))

    def resident(shape):
        return pl.BlockSpec(shape, lambda i: (0, 0))

    weight_bytes = sum(int(a.size) * a.dtype.itemsize
                       for a in (w0, b0, w1, b1, w2t, b2))
    cost = pl.CostEstimate(
        flops=2 * b_pad * (N_FEATURES * HIDDEN + HIDDEN * HIDDEN + HIDDEN * N_OUT),
        transcendentals=b_pad * N_OUT,
        bytes_accessed=b_pad * (N_FEATURES + N_OUT) * 4 + weight_bytes,
    )

    out = pl.pallas_call(
        _generator_kernel,
        out_shape=jax.ShapeDtypeStruct((b_pad, N_OUT), jnp.float32),
        grid=(b_pad // tb,),
        in_specs=[
            pl.BlockSpec((tb, N_FEATURES), lambda i: (i, 0)),   # x: streamed
            resident((N_FEATURES, HIDDEN)),                     # w0
            resident((1, HIDDEN)),                              # b0
            resident((HIDDEN, HIDDEN)),                         # w1 (bf16, MXU)
            resident((1, HIDDEN)),                              # b1
            resident((N_OUT, HIDDEN)),                          # w2^T
            resident((1, N_OUT)),                               # b2
        ],
        out_specs=pl.BlockSpec((tb, N_OUT), lambda i: (i, 0)),
        compiler_params=pltpu.CompilerParams(
            dimension_semantics=("parallel",),                  # megacore on v7x
            vmem_limit_bytes=caps["vmem_limit"],
        ),
        cost_estimate=cost,
    )(x, w0, b0, w1, b1, w2t, b2)

    return out[:B]


def prepare_params(w0, b0, w1, b1, w2, b2, act_dtype=None):
    """One-time packing: transpose / reshape / dtype casts done at init,
    not per forward call."""
    if act_dtype is None:
        act_dtype = default_act_dtype()
    act_dtype = jnp.dtype(act_dtype)
    return (w0.astype(act_dtype),                          # [2, 256]
            b0.reshape(1, HIDDEN).astype(act_dtype),       # [1, 256]
            w1.astype(jnp.bfloat16),                       # [256, 256]  (MXU)
            b1.reshape(1, HIDDEN).astype(act_dtype),       # [1, 256]
            jnp.transpose(w2).astype(act_dtype),           # [2, 256]  (w2^T)
            b2.reshape(1, N_OUT).astype(jnp.float32))      # [1, 2]


def init_params(key):
    """Deterministic Linear-layer init (uniform +/- 1/sqrt(fan_in), like torch)."""
    k = jax.random.split(key, 6)

    def lin(kw, kb, fan_in, fan_out):
        bound = 1.0 / jnp.sqrt(fan_in)
        w = jax.random.uniform(kw, (fan_in, fan_out), jnp.float32, -bound, bound)
        b = jax.random.uniform(kb, (fan_out,), jnp.float32, -bound, bound)
        return w, b

    w0, b0 = lin(k[0], k[1], N_FEATURES, HIDDEN)
    w1, b1 = lin(k[2], k[3], HIDDEN, HIDDEN)
    w2, b2 = lin(k[4], k[5], HIDDEN, N_OUT)
    return w0, b0, w1, b1, w2, b2


def reference_forward(x, w0, b0, w1, b1, w2, b2):
    def leaky(v):
        return jnp.where(v > 0, v, 0.2 * v)
    h0 = leaky(x @ w0 + b0)
    h1 = leaky(h0 @ w1 + b1)
    return jnp.tanh(h1 @ w2 + b2)


if __name__ == "__main__":
    key = jax.random.PRNGKey(0)
    k_x, k_p = jax.random.split(key)

    B = 512  # small demo batch; tile clamp gives a 2-step pipelined grid
    x = jax.random.normal(k_x, (B, N_FEATURES), jnp.float32)
    w0, b0, w1, b1, w2, b2 = init_params(k_p)
    params = prepare_params(w0, b0, w1, b1, w2, b2)

    out = generator_forward(x, params)
    out = jax.block_until_ready(out)

    ref = reference_forward(x, w0, b0, w1, b1, w2, b2)
    assert out.shape == (B, N_OUT), out.shape
    max_err = float(jnp.max(jnp.abs(out - ref)))
    # bf16 MXU matmul (f32 acc) + bf16 activations on v6e/v7x: loosened
    # tolerance vs the pure-f32 reference.
    assert max_err < 5e-2, max_err

    print("KERNEL_OK")
</pallas_src>

<mosaic_0001>
module attributes {stable_mosaic.version = 11 : i64} {
  func.func @_generator_kernel(%arg0: i32, %arg1: memref<256x2xf32, #tpu.memory_space<vmem>>, %arg2: memref<2x256xf32, #tpu.memory_space<vmem>>, %arg3: memref<1x256xf32, #tpu.memory_space<vmem>>, %arg4: memref<256x256xbf16, #tpu.memory_space<vmem>>, %arg5: memref<1x256xf32, #tpu.memory_space<vmem>>, %arg6: memref<2x256xf32, #tpu.memory_space<vmem>>, %arg7: memref<1x2xf32, #tpu.memory_space<vmem>>, %arg8: memref<256x2xf32, #tpu.memory_space<vmem>>) attributes {dimension_semantics = [#tpu.dimension_semantics<parallel>], iteration_bounds = array<i64: 2>, scalar_prefetch = 0 : i64, scratch_operands = 0 : i64, tpu.core_type = #tpu.core_type<tc>, window_params = [{transform_indices = @transform_0, window_bounds = array<i64: 256, 2>}, {pipeline_mode = #tpu.pipeline_mode<synchronous>, transform_indices = @transform_1, window_bounds = array<i64: 2, 256>}, {pipeline_mode = #tpu.pipeline_mode<synchronous>, transform_indices = @transform_2, window_bounds = array<i64: 1, 256>}, {pipeline_mode = #tpu.pipeline_mode<synchronous>, transform_indices = @transform_3, window_bounds = array<i64: 256, 256>}, {pipeline_mode = #tpu.pipeline_mode<synchronous>, transform_indices = @transform_4, window_bounds = array<i64: 1, 256>}, {pipeline_mode = #tpu.pipeline_mode<synchronous>, transform_indices = @transform_5, window_bounds = array<i64: 2, 256>}, {pipeline_mode = #tpu.pipeline_mode<synchronous>, transform_indices = @transform_6, window_bounds = array<i64: 1, 2>}, {transform_indices = @transform_7, window_bounds = array<i64: 256, 2>}]} {
    %c0 = arith.constant 0 : index
    %c0_0 = arith.constant 0 : index
    %0 = vector.load %arg1[%c0, %c0_0] : memref<256x2xf32, #tpu.memory_space<vmem>>, vector<256x2xf32>
    %c0_1 = arith.constant 0 : index
    %c0_2 = arith.constant 0 : index
    %1 = vector.load %arg2[%c0_1, %c0_2] : memref<2x256xf32, #tpu.memory_space<vmem>>, vector<2x256xf32>
    %2 = vector.extract_strided_slice %0 {offsets = [0, 0], sizes = [256, 1], strides = [1, 1]} : vector<256x2xf32> to vector<256x1xf32>
    %3 = vector.extract_strided_slice %1 {offsets = [0, 0], sizes = [1, 256], strides = [1, 1]} : vector<2x256xf32> to vector<1x256xf32>
    %4 = vector.broadcast %2 : vector<256x1xf32> to vector<256x256xf32>
    %5 = vector.broadcast %3 : vector<1x256xf32> to vector<256x256xf32>
    %6 = arith.mulf %4, %5 : vector<256x256xf32>
    %7 = vector.extract_strided_slice %0 {offsets = [0, 1], sizes = [256, 1], strides = [1, 1]} : vector<256x2xf32> to vector<256x1xf32>
    %8 = vector.extract_strided_slice %1 {offsets = [1, 0], sizes = [1, 256], strides = [1, 1]} : vector<2x256xf32> to vector<1x256xf32>
    %9 = vector.broadcast %7 : vector<256x1xf32> to vector<256x256xf32>
    %10 = vector.broadcast %8 : vector<1x256xf32> to vector<256x256xf32>
    %11 = arith.mulf %9, %10 : vector<256x256xf32>
    %12 = arith.addf %6, %11 : vector<256x256xf32>
    %c0_3 = arith.constant 0 : index
    %c0_4 = arith.constant 0 : index
    %13 = vector.load %arg3[%c0_3, %c0_4] : memref<1x256xf32, #tpu.memory_space<vmem>>, vector<1x256xf32>
    %14 = vector.broadcast %13 : vector<1x256xf32> to vector<256x256xf32>
    %15 = arith.addf %12, %14 : vector<256x256xf32>
    %cst = arith.constant 2.000000e-01 : f32
    %16 = vector.broadcast %cst : f32 to vector<256x256xf32>
    %17 = arith.mulf %16, %15 : vector<256x256xf32>
    %18 = arith.maximumf %15, %17 : vector<256x256xf32>
    %19 = arith.truncf %18 : vector<256x256xf32> to vector<256x256xbf16>
    %c0_5 = arith.constant 0 : index
    %c0_6 = arith.constant 0 : index
    %20 = vector.load %arg4[%c0_5, %c0_6] : memref<256x256xbf16, #tpu.memory_space<vmem>>, vector<256x256xbf16>
    %cst_7 = arith.constant dense<0.000000e+00> : vector<256x256xf32>
    %21 = tpu.matmul %19, %20, %cst_7 {dimension_numbers = #tpu.dot_dimension_numbers<[1], [0], [0], [1], [0, 0, 1, 1], [], []>} : vector<256x256xbf16>, vector<256x256xbf16>, vector<256x256xf32> -> vector<256x256xf32>
    %c0_8 = arith.constant 0 : index
    %c0_9 = arith.constant 0 : index
    %22 = vector.load %arg5[%c0_8, %c0_9] : memref<1x256xf32, #tpu.memory_space<vmem>>, vector<1x256xf32>
    %23 = vector.broadcast %22 : vector<1x256xf32> to vector<256x256xf32>
    %24 = arith.addf %21, %23 : vector<256x256xf32>
    %cst_10 = arith.constant 2.000000e-01 : f32
    %25 = vector.broadcast %cst_10 : f32 to vector<256x256xf32>
    %26 = arith.mulf %25, %24 : vector<256x256xf32>
    %27 = arith.maximumf %24, %26 : vector<256x256xf32>
    %c0_11 = arith.constant 0 : index
    %c0_12 = arith.constant 0 : index
    %28 = vector.load %arg6[%c0_11, %c0_12] : memref<2x256xf32, #tpu.memory_space<vmem>>, vector<2x256xf32>
    %29 = vector.extract_strided_slice %28 {offsets = [0, 0], sizes = [1, 256], strides = [1, 1]} : vector<2x256xf32> to vector<1x256xf32>
    %30 = vector.broadcast %29 : vector<1x256xf32> to vector<256x256xf32>
    %31 = arith.mulf %27, %30 : vector<256x256xf32>
    %32 = vector.extract_strided_slice %28 {offsets = [1, 0], sizes = [1, 256], strides = [1, 1]} : vector<2x256xf32> to vector<1x256xf32>
    %33 = vector.broadcast %32 : vector<1x256xf32> to vector<256x256xf32>
    %34 = arith.mulf %27, %33 : vector<256x256xf32>
    %cst_13 = arith.constant dense<0.000000e+00> : vector<256xf32>
    %35 = vector.multi_reduction <add>, %31, %cst_13 [1] : vector<256x256xf32> to vector<256xf32>
    %36 = vector.shape_cast %35 : vector<256xf32> to vector<256x1xf32>
    %c0_14 = arith.constant 0 : index
    %c0_15 = arith.constant 0 : index
    %37 = vector.load %arg7[%c0_14, %c0_15] : memref<1x2xf32, #tpu.memory_space<vmem>>, vector<1x1xf32>
    %38 = vector.broadcast %37 : vector<1x1xf32> to vector<256x1xf32>
    %39 = arith.addf %36, %38 : vector<256x1xf32>
    %cst_16 = arith.constant dense<0.000000e+00> : vector<256xf32>
    %40 = vector.multi_reduction <add>, %34, %cst_16 [1] : vector<256x256xf32> to vector<256xf32>
    %41 = vector.shape_cast %40 : vector<256xf32> to vector<256x1xf32>
    %c0_17 = arith.constant 0 : index
    %c1 = arith.constant 1 : index
    %42 = vector.load %arg7[%c0_17, %c1] : memref<1x2xf32, #tpu.memory_space<vmem>>, vector<1x1xf32>
    %43 = vector.broadcast %42 : vector<1x1xf32> to vector<256x1xf32>
    %44 = arith.addf %41, %43 : vector<256x1xf32>
    %45 = math.tanh %39 : vector<256x1xf32>
    %c0_18 = arith.constant 0 : index
    %c0_19 = arith.constant 0 : index
    %46 = vector.load %arg8[%c0_18, %c0_19] : memref<256x2xf32, #tpu.memory_space<vmem>>, vector<256x1xf32>
    tpu.vector_store %arg8[%c0_18, %c0_19], %45 {strides = array<i32>} : memref<256x2xf32, #tpu.memory_space<vmem>>, vector<256x1xf32>,
    %47 = math.tanh %44 : vector<256x1xf32>
    %c0_20 = arith.constant 0 : index
    %c1_21 = arith.constant 1 : index
    %48 = vector.load %arg8[%c0_20, %c1_21] : memref<256x2xf32, #tpu.memory_space<vmem>>, vector<256x1xf32>
    tpu.vector_store %arg8[%c0_20, %c1_21], %47 {strides = array<i32>} : memref<256x2xf32, #tpu.memory_space<vmem>>, vector<256x1xf32>,
    return
  }
  func.func @transform_0(%arg0: i32) -> (i32, i32) {
    %c0_i32 = arith.constant 0 : i32
    %c0_i32_0 = arith.constant 0 : i32
    return %arg0, %c0_i32 : i32, i32
  }
  func.func @transform_1(%arg0: i32) -> (i32, i32) {
    %c0_i32 = arith.constant 0 : i32
    %c0_i32_0 = arith.constant 0 : i32
    %c0_i32_1 = arith.constant 0 : i32
    return %c0_i32, %c0_i32_0 : i32, i32
  }
  func.func @transform_2(%arg0: i32) -> (i32, i32) {
    %c0_i32 = arith.constant 0 : i32
    %c0_i32_0 = arith.constant 0 : i32
    %c0_i32_1 = arith.constant 0 : i32
    return %c0_i32, %c0_i32_0 : i32, i32
  }
  func.func @transform_3(%arg0: i32) -> (i32, i32) {
    %c0_i32 = arith.constant 0 : i32
    %c0_i32_0 = arith.constant 0 : i32
    %c0_i32_1 = arith.constant 0 : i32
    return %c0_i32, %c0_i32_0 : i32, i32
  }
  func.func @transform_4(%arg0: i32) -> (i32, i32) {
    %c0_i32 = arith.constant 0 : i32
    %c0_i32_0 = arith.constant 0 : i32
    %c0_i32_1 = arith.constant 0 : i32
    return %c0_i32, %c0_i32_0 : i32, i32
  }
  func.func @transform_5(%arg0: i32) -> (i32, i32) {
    %c0_i32 = arith.constant 0 : i32
    %c0_i32_0 = arith.constant 0 : i32
    %c0_i32_1 = arith.constant 0 : i32
    return %c0_i32, %c0_i32_0 : i32, i32
  }
  func.func @transform_6(%arg0: i32) -> (i32, i32) {
    %c0_i32 = arith.constant 0 : i32
    %c0_i32_0 = arith.constant 0 : i32
    %c0_i32_1 = arith.constant 0 : i32
    return %c0_i32, %c0_i32_0 : i32, i32
  }
  func.func @transform_7(%arg0: i32) -> (i32, i32) {
    %c0_i32 = arith.constant 0 : i32
    %c0_i32_0 = arith.constant 0 : i32
    return %arg0, %c0_i32 : i32, i32
  }
}

</mosaic_0001>

<llo_original>
// kernel: generator_forward.1
$region0: #{generator_forward.1}
  #allocation0 [shape = 'u32[]', space=smem, size = 0x4, offset = 0x4, fixed_abs, tag = 'smem constant byte address 0x4 - core index']
  #allocation1 [shape = 'u32[144,128]{1,0:T(1,128)}', space=vmem, size = 0x12000, scoped, tag = 'internal scratch']
  %s0 = inlined_call_operand.vmem [shape: f32[512,2], index: 0, kind: input, shape index: {}]
  %s1 = inlined_call_operand.vmem [shape: f32[2,256], index: 1, kind: input, shape index: {}]
  %s2 = inlined_call_operand.vmem [shape: f32[1,256], index: 2, kind: input, shape index: {}]
  %s3 = inlined_call_operand.vmem [shape: bf16[256,256], index: 3, kind: input, shape index: {}]
  %s4 = inlined_call_operand.vmem [shape: f32[1,256], index: 4, kind: input, shape index: {}]
  %s5 = inlined_call_operand.vmem [shape: f32[2,256], index: 5, kind: input, shape index: {}]
  %s6 = inlined_call_operand.vmem [shape: f32[1,2], index: 6, kind: input, shape index: {}]
  %s7 = inlined_call_operand.vmem [shape: f32[512,2], index: 7, kind: output, shape index: {}]
  %s8 = sld [smem:[#allocation0]]
  $region61: #{generator_forward.1} parent=0
    _
  %s10 = ssub.s32 1, %s8
  %s11 = scalar_select 0, %s10, %s8
  loop: start=0, step=1, limit=4
  $region2: #{generator_forward.1} parent=0 // loop_pre_header
    _
  $region3: #{generator_forward.1} parent=0 // loop_header
    %s13 = sphi 0, %s17
    %p14 = scmp.ge.s32.totalorder %s13, 4
    %s23 = sphi 0, %s25
    %s26 = sphi 0, %s23
    %s27 = sphi 0, %s26
    %s43 = sphi 0, %s27
    %s47 = sphi 0, %s47
    %s49 = sphi 0, %s47
    %s50 = sphi 0, %s49
    %s64 = sphi 0, %s50
    %s68 = sphi 0, %s68
    %s70 = sphi 0, %s68
    %s71 = sphi 0, %s70
    %s85 = sphi 0, %s71
    %s89 = sphi 0, %s89
    %s91 = sphi 0, %s89
    %s92 = sphi 0, %s91
    %s106 = sphi 0, %s92
    %s110 = sphi 0, %s110
    %s112 = sphi 0, %s110
    %s113 = sphi 0, %s112
    %s127 = sphi 0, %s113
    %s131 = sphi 0, %s131
    %s133 = sphi 0, %s131
    %s134 = sphi 0, %s133
    %s148 = sphi 0, %s134
    %s152 = sphi 0, %s152
    %s154 = sphi 0, %s152
    %s155 = sphi 0, %s154
    %s169 = sphi 0, %s155
    %s175 = sphi 0, %s177
    %s178 = sphi 0, %s175
    %s179 = sphi 0, %s178
    %s195 = sphi 0, %s179
  $region4: #{generator_forward.1} parent=0 // loop_header_branch
    %16 = sbr.rel (%p14) target = $region8
  $region5: #{generator_forward.1} parent=0 // loop_body
    %s18 = ssub.s32 %s13, 1
    %s19 = ssub.s32 %s13, 2
    %s20 = sadd.s32 %s13, 1
    %s21 = ssub.s32 %s13, %s20
    %p22 = scmp.eq.s32.totalorder %s21, 0
    %s24 = sadd.s32 %s23, 1
    %s25 = scalar_select %p22, %s23, %s24
    %p28 = pneg %p22
    %p29 = scmp.eq.s32.totalorder %s13, 1
    %p30 = por %p28, %p29
    %p31 = scmp.ne.s32.totalorder %s23, %s26
    %p32 = scmp.eq.s32.totalorder %s13, 0
    %p33 = por %p31, %p32
    %p34 = scmp.ne.s32.totalorder %s23, %s26
    %p35 = scmp.eq.s32.totalorder %s18, 1
    %p36 = por %p34, %p35
    %p37 = scmp.ne.s32.totalorder %s26, %s27
    %p38 = scmp.eq.s32.totalorder %s18, 0
    %p39 = por %p37, %p38
    %p40 = scmp.ne.s32.totalorder %s26, %s27
    %p41 = scmp.eq.s32.totalorder %s19, 1
    %p42 = por %p40, %p41
    %p44 = scmp.ne.s32.totalorder %s27, %s43
    %p45 = scmp.eq.s32.totalorder %s19, 0
    %p46 = por %p44, %p45
    %s48 = sadd.s32 %s47, 1
    %p51 = scmp.eq.s32.totalorder %s13, 1
    %p52 = scmp.ne.s32.totalorder %s47, %s49
    %p53 = scmp.eq.s32.totalorder %s13, 0
    %p54 = por %p52, %p53
    %p55 = scmp.ne.s32.totalorder %s47, %s49
    %p56 = scmp.eq.s32.totalorder %s18, 1
    %p57 = por %p55, %p56
    %p58 = scmp.ne.s32.totalorder %s49, %s50
    %p59 = scmp.eq.s32.totalorder %s18, 0
    %p60 = por %p58, %p59
    %p61 = scmp.ne.s32.totalorder %s49, %s50
    %p62 = scmp.eq.s32.totalorder %s19, 1
    %p63 = por %p61, %p62
    %p65 = scmp.ne.s32.totalorder %s50, %s64
    %p66 = scmp.eq.s32.totalorder %s19, 0
    %p67 = por %p65, %p66
    %s69 = sadd.s32 %s68, 1
    %p72 = scmp.eq.s32.totalorder %s13, 1
    %p73 = scmp.ne.s32.totalorder %s68, %s70
    %p74 = scmp.eq.s32.totalorder %s13, 0
    %p75 = por %p73, %p74
    %p76 = scmp.ne.s32.totalorder %s68, %s70
    %p77 = scmp.eq.s32.totalorder %s18, 1
    %p78 = por %p76, %p77
    %p79 = scmp.ne.s32.totalorder %s70, %s71
    %p80 = scmp.eq.s32.totalorder %s18, 0
    %p81 = por %p79, %p80
    %p82 = scmp.ne.s32.totalorder %s70, %s71
    %p83 = scmp.eq.s32.totalorder %s19, 1
    %p84 = por %p82, %p83
    %p86 = scmp.ne.s32.totalorder %s71, %s85
    %p87 = scmp.eq.s32.totalorder %s19, 0
    %p88 = por %p86, %p87
    %s90 = sadd.s32 %s89, 1
    %p93 = scmp.eq.s32.totalorder %s13, 1
    %p94 = scmp.ne.s32.totalorder %s89, %s91
    %p95 = scmp.eq.s32.totalorder %s13, 0
    %p96 = por %p94, %p95
    %p97 = scmp.ne.s32.totalorder %s89, %s91
    %p98 = scmp.eq.s32.totalorder %s18, 1
    %p99 = por %p97, %p98
    %p100 = scmp.ne.s32.totalorder %s91, %s92
    %p101 = scmp.eq.s32.totalorder %s18, 0
    %p102 = por %p100, %p101
    %p103 = scmp.ne.s32.totalorder %s91, %s92
    %p104 = scmp.eq.s32.totalorder %s19, 1
    %p105 = por %p103, %p104
    %p107 = scmp.ne.s32.totalorder %s92, %s106
    %p108 = scmp.eq.s32.totalorder %s19, 0
    %p109 = por %p107, %p108
    %s111 = sadd.s32 %s110, 1
    %p114 = scmp.eq.s32.totalorder %s13, 1
    %p115 = scmp.ne.s32.totalorder %s110, %s112
    %p116 = scmp.eq.s32.totalorder %s13, 0
    %p117 = por %p115, %p116
    %p118 = scmp.ne.s32.totalorder %s110, %s112
    %p119 = scmp.eq.s32.totalorder %s18, 1
    %p120 = por %p118, %p119
    %p121 = scmp.ne.s32.totalorder %s112, %s113
    %p122 = scmp.eq.s32.totalorder %s18, 0
    %p123 = por %p121, %p122
    %p124 = scmp.ne.s32.totalorder %s112, %s113
    %p125 = scmp.eq.s32.totalorder %s19, 1
    %p126 = por %p124, %p125
    %p128 = scmp.ne.s32.totalorder %s113, %s127
    %p129 = scmp.eq.s32.totalorder %s19, 0
    %p130 = por %p128, %p129
    %s132 = sadd.s32 %s131, 1
    %p135 = scmp.eq.s32.totalorder %s13, 1
    %p136 = scmp.ne.s32.totalorder %s131, %s133
    %p137 = scmp.eq.s32.totalorder %s13, 0
    %p138 = por %p136, %p137
    %p139 = scmp.ne.s32.totalorder %s131, %s133
    %p140 = scmp.eq.s32.totalorder %s18, 1
    %p141 = por %p139, %p140
    %p142 = scmp.ne.s32.totalorder %s133, %s134
    %p143 = scmp.eq.s32.totalorder %s18, 0
    %p144 = por %p142, %p143
    %p145 = scmp.ne.s32.totalorder %s133, %s134
    %p146 = scmp.eq.s32.totalorder %s19, 1
    %p147 = por %p145, %p146
    %p149 = scmp.ne.s32.totalorder %s134, %s148
    %p150 = scmp.eq.s32.totalorder %s19, 0
    %p151 = por %p149, %p150
    %s153 = sadd.s32 %s152, 1
    %p156 = scmp.eq.s32.totalorder %s13, 1
    %p157 = scmp.ne.s32.totalorder %s152, %s154
    %p158 = scmp.eq.s32.totalorder %s13, 0
    %p159 = por %p157, %p158
    %p160 = scmp.ne.s32.totalorder %s152, %s154
    %p161 = scmp.eq.s32.totalorder %s18, 1
    %p162 = por %p160, %p161
    %p163 = scmp.ne.s32.totalorder %s154, %s155
    %p164 = scmp.eq.s32.totalorder %s18, 0
    %p165 = por %p163, %p164
    %p166 = scmp.ne.s32.totalorder %s154, %s155
    %p167 = scmp.eq.s32.totalorder %s19, 1
    %p168 = por %p166, %p167
    %p170 = scmp.ne.s32.totalorder %s155, %s169
    %p171 = scmp.eq.s32.totalorder %s19, 0
    %p172 = por %p170, %p171
    %s173 = ssub.s32 %s13, %s20
    %p174 = scmp.eq.s32.totalorder %s173, 0
    %s176 = sadd.s32 %s175, 1
    %s177 = scalar_select %p174, %s175, %s176
    %p180 = pneg %p174
    %p181 = scmp.eq.s32.totalorder %s13, 1
    %p182 = por %p180, %p181
    %p183 = scmp.ne.s32.totalorder %s175, %s178
    %p184 = scmp.eq.s32.totalorder %s13, 0
    %p185 = por %p183, %p184
    %p186 = scmp.ne.s32.totalorder %s175, %s178
    %p187 = scmp.eq.s32.totalorder %s18, 1
    %p188 = por %p186, %p187
    %p189 = scmp.ne.s32.totalorder %s178, %s179
    %p190 = scmp.eq.s32.totalorder %s18, 0
    %p191 = por %p189, %p190
    %p192 = scmp.ne.s32.totalorder %s178, %s179
    %p193 = scmp.eq.s32.totalorder %s19, 1
    %p194 = por %p192, %p193
    %p196 = scmp.ne.s32.totalorder %s179, %s195
    %p197 = scmp.eq.s32.totalorder %s19, 0
    %p198 = por %p196, %p197
    %p199 = scmp.le.s32.totalorder 1, %s13
    %p200 = scmp.lt.s32.totalorder %s13, 3
    %p201 = pnand %p199, %p200
    %p202 = pneg %p201
    // Predicated region
    $region9: #{generator_forward.1} parent=5 // pred_check
      _
    $region10: #{generator_forward.1} parent=5 // pred_check_branch
      %204 = sbr.rel (%p201) target = $region12
    $region11: #{generator_forward.1} parent=5 // pred_region
      %s205 = ssub.s32 %s13, 1
      // Predicated region
      $region13: #{generator_forward.1} parent=11 // pred_check
        %p206 = pneg %p60
      $region14: #{generator_forward.1} parent=11 // pred_check_branch
        %208 = sbr.rel (%p206) target = $region16
      $region15: #{generator_forward.1} parent=11 // pred_region
        _
      $region16: #{generator_forward.1} parent=11 // pred_fallthru
        _
      // Predicated region
      $region17: #{generator_forward.1} parent=11 // pred_check
        %p209 = pneg %p81
      $region18: #{generator_forward.1} parent=11 // pred_check_branch
        %211 = sbr.rel (%p209) target = $region20
      $region19: #{generator_forward.1} parent=11 // pred_region
        _
      $region20: #{generator_forward.1} parent=11 // pred_fallthru
        _
      // Predicated region
      $region21: #{generator_forward.1} parent=11 // pred_check
        %p212 = pneg %p102
      $region22: #{generator_forward.1} parent=11 // pred_check_branch
        %214 = sbr.rel (%p212) target = $region24
      $region23: #{generator_forward.1} parent=11 // pred_region
        _
      $region24: #{generator_forward.1} parent=11 // pred_fallthru
        _
      // Predicated region
      $region25: #{generator_forward.1} parent=11 // pred_check
        %p215 = pneg %p123
      $region26: #{generator_forward.1} parent=11 // pred_check_branch
        %217 = sbr.rel (%p215) target = $region28
      $region27: #{generator_forward.1} parent=11 // pred_region
        _
      $region28: #{generator_forward.1} parent=11 // pred_fallthru
        _
      // Predicated region
      $region29: #{generator_forward.1} parent=11 // pred_check
        %p218 = pneg %p144
      $region30: #{generator_forward.1} parent=11 // pred_check_branch
        %220 = sbr.rel (%p218) target = $region32
      $region31: #{generator_forward.1} parent=11 // pred_region
        _
      $region32: #{generator_forward.1} parent=11 // pred_fallthru
        _
      // Predicated region
      $region33: #{generator_forward.1} parent=11 // pred_check
        %p221 = pneg %p165
      $region34: #{generator_forward.1} parent=11 // pred_check_branch
        %223 = sbr.rel (%p221) target = $region36
      $region35: #{generator_forward.1} parent=11 // pred_region
        _
      $region36: #{generator_forward.1} parent=11 // pred_fallthru
        _
    $region12: #{generator_forward.1} parent=5 // pred_fallthru
      _
    %p224 = scmp.lt.s32.totalorder %s13, 2
    // Predicated region
    $region37: #{generator_forward.1} parent=5 // pred_check
      %p225 = pneg %p224
    $region38: #{generator_forward.1} parent=5 // pred_check_branch
      %227 = sbr.rel (%p225) target = $region40
    $region39: #{generator_forward.1} parent=5 // pred_region
      // Predicated region
      $region41: #{generator_forward.1} parent=39 // pred_check
        %p228 = pneg %p33
      $region42: #{generator_forward.1} parent=39 // pred_check_branch
        %230 = sbr.rel (%p228) target = $region44
      $region43: #{generator_forward.1} parent=39 // pred_region
        %s231 = smul.u32 32, %s13
        %p232 = scmp.lt.s32.totalorder %s231, 63
        %s233 = scalar_select %p232, %s231, 63
        %s234 = smul.addr %s233, 8
        %s235 = scalar_lea.vmem %s0, %s234
        %s236 = smul.u32 32, %s13
      $region44: #{generator_forward.1} parent=39 // pred_fallthru
        _
    $region40: #{generator_forward.1} parent=5 // pred_fallthru
      _
    %p237 = scmp.le.s32.totalorder 1, %s13
    %p238 = scmp.lt.s32.totalorder %s13, 3
    %p239 = pnand %p237, %p238
    %p240 = pneg %p239
    // Predicated region
    $region45: #{generator_forward.1} parent=5 // pred_check
      _
    $region46: #{generator_forward.1} parent=5 // pred_check_branch
      %242 = sbr.rel (%p239) target = $region48
    $region47: #{generator_forward.1} parent=5 // pred_region
      %s243 = ssub.s32 %s13, 1
      %s244 = smul.u32 32, %s18
      %p245 = scmp.lt.s32.totalorder %s244, 63
      %s246 = scalar_select %p245, %s244, 63
      %s247 = smul.addr %s246, 8
      %s248 = scalar_lea.vmem %s0, %s247
      %p249 = pneg %p39
      %p250 = pneg %p36
      %p251 = pneg %p60
      %p252 = pneg %p57
      %p253 = pneg %p81
      %p254 = pneg %p78
      %p255 = pneg %p102
      %p256 = pneg %p99
      %p257 = pneg %p123
      %p258 = pneg %p120
      %p259 = pneg %p144
      %p260 = pneg %p141
      %p261 = pneg %p165
      %p262 = pneg %p162
      %p263 = pneg %p191
      %p264 = pneg %p188
      %s265 = smul.u32 32, %s18
      %p266 = scmp.lt.s32.totalorder %s265, 63
      %s267 = scalar_select %p266, %s265, 63
      %s268 = smul.addr %s267, 8
      %s269 = scalar_lea.vmem %s7, %s268
      %s270 = smul.u32 32, %s18
      %p271 = scmp.lt.s32.totalorder %s270, 63
      %s272 = scalar_select %p271, %s270, 63
      %s273 = smul.addr %s272, 8
      %s274 = scalar_lea.vmem %s0, %s273
      %s275 = smul.u32 32, %s18
      %s276 = smul.u32 32, %s18
      %p277 = scmp.lt.s32.totalorder %s276, 63
      %s278 = scalar_select %p277, %s276, 63
      %s279 = smul.addr %s278, 8
      %s280 = scalar_lea.vmem %s7, %s279
      %s281 = smul.u32 32, %s18
      %v282 = vld [vmem:[%s274] sm:$0xff]
      %v283 = vld [vmem:[%s274 + $0x8] sm:$0xff]
      %v284 = vld [vmem:[%s274 + $0x10] sm:$0xff]
      %v285 = vld [vmem:[%s274 + $0x18] sm:$0xff]
      %v286 = vld [vmem:[%s274 + $0x20] sm:$0xff]
      %v287 = vld [vmem:[%s274 + $0x28] sm:$0xff]
      %v288 = vld [vmem:[%s274 + $0x30] sm:$0xff]
      %v289 = vld [vmem:[%s274 + $0x38] sm:$0xff]
      %v290 = vld [vmem:[%s274 + $0x40] sm:$0xff]
      %v291 = vld [vmem:[%s274 + $0x48] sm:$0xff]
      %v292 = vld [vmem:[%s274 + $0x50] sm:$0xff]
      %v293 = vld [vmem:[%s274 + $0x58] sm:$0xff]
      %v294 = vld [vmem:[%s274 + $0x60] sm:$0xff]
      %v295 = vld [vmem:[%s274 + $0x68] sm:$0xff]
      %v296 = vld [vmem:[%s274 + $0x70] sm:$0xff]
      %v297 = vld [vmem:[%s274 + $0x78] sm:$0xff]
      %v298 = vld [vmem:[%s274 + $0x80] sm:$0xff]
      %v299 = vld [vmem:[%s274 + $0x88] sm:$0xff]
      %v300 = vld [vmem:[%s274 + $0x90] sm:$0xff]
      %v301 = vld [vmem:[%s274 + $0x98] sm:$0xff]
      %v302 = vld [vmem:[%s274 + $0xa0] sm:$0xff]
      %v303 = vld [vmem:[%s274 + $0xa8] sm:$0xff]
      %v304 = vld [vmem:[%s274 + $0xb0] sm:$0xff]
      %v305 = vld [vmem:[%s274 + $0xb8] sm:$0xff]
      %v306 = vld [vmem:[%s274 + $0xc0] sm:$0xff]
      %v307 = vld [vmem:[%s274 + $0xc8] sm:$0xff]
      %v308 = vld [vmem:[%s274 + $0xd0] sm:$0xff]
      %v309 = vld [vmem:[%s274 + $0xd8] sm:$0xff]
      %v310 = vld [vmem:[%s274 + $0xe0] sm:$0xff]
      %v311 = vld [vmem:[%s274 + $0xe8] sm:$0xff]
      %v312 = vld [vmem:[%s274 + $0xf0] sm:$0xff]
      %v313 = vld [vmem:[%s274 + $0xf8] sm:$0xff]
      %v314 = vld [vmem:[%s1] sm:$0xf]
      %316 = vset.pattern.permute.xlu0 0
      %317 = vperm.xlu0 %316, %v282
      %v318 = vpop.permute.xlu0 %317
      %321 = vset.pattern.permute.xlu0 0
      %322 = vperm.xlu0 %321, %v283
      %v323 = vpop.permute.xlu0 %322
      %326 = vset.pattern.permute.xlu0 0
      %327 = vperm.xlu0 %326, %v284
      %v328 = vpop.permute.xlu0 %327
      %331 = vset.pattern.permute.xlu0 0
      %332 = vperm.xlu0 %331, %v285
      %v333 = vpop.permute.xlu0 %332
      %336 = vset.pattern.permute.xlu0 0
      %337 = vperm.xlu0 %336, %v286
      %v338 = vpop.permute.xlu0 %337
      %341 = vset.pattern.permute.xlu0 0
      %342 = vperm.xlu0 %341, %v287
      %v343 = vpop.permute.xlu0 %342
      %346 = vset.pattern.permute.xlu0 0
      %347 = vperm.xlu0 %346, %v288
      %v348 = vpop.permute.xlu0 %347
      %351 = vset.pattern.permute.xlu0 0
      %352 = vperm.xlu0 %351, %v289
      %v353 = vpop.permute.xlu0 %352
      %356 = vset.pattern.permute.xlu0 0
      %357 = vperm.xlu0 %356, %v290
      %v358 = vpop.permute.xlu0 %357
      %361 = vset.pattern.permute.xlu0 0
      %362 = vperm.xlu0 %361, %v291
      %v363 = vpop.permute.xlu0 %362
      %366 = vset.pattern.permute.xlu0 0
      %367 = vperm.xlu0 %366, %v292
      %v368 = vpop.permute.xlu0 %367
      %371 = vset.pattern.permute.xlu0 0
      %372 = vperm.xlu0 %371, %v293
      %v373 = vpop.permute.xlu0 %372
      %376 = vset.pattern.permute.xlu0 0
      %377 = vperm.xlu0 %376, %v294
      %v378 = vpop.permute.xlu0 %377
      %381 = vset.pattern.permute.xlu0 0
      %382 = vperm.xlu0 %381, %v295
      %v383 = vpop.permute.xlu0 %382
      %386 = vset.pattern.permute.xlu0 0
      %387 = vperm.xlu0 %386, %v296
      %v388 = vpop.permute.xlu0 %387
      %391 = vset.pattern.permute.xlu0 0
      %392 = vperm.xlu0 %391, %v297
      %v393 = vpop.permute.xlu0 %392
      %396 = vset.pattern.permute.xlu0 0
      %397 = vperm.xlu0 %396, %v298
      %v398 = vpop.permute.xlu0 %397
      %401 = vset.pattern.permute.xlu0 0
      %402 = vperm.xlu0 %401, %v299
      %v403 = vpop.permute.xlu0 %402
      %406 = vset.pattern.permute.xlu0 0
      %407 = vperm.xlu0 %406, %v300
      %v408 = vpop.permute.xlu0 %407
      %411 = vset.pattern.permute.xlu0 0
      %412 = vperm.xlu0 %411, %v301
      %v413 = vpop.permute.xlu0 %412
      %416 = vset.pattern.permute.xlu0 0
      %417 = vperm.xlu0 %416, %v302
      %v418 = vpop.permute.xlu0 %417
      %421 = vset.pattern.permute.xlu0 0
      %422 = vperm.xlu0 %421, %v303
      %v423 = vpop.permute.xlu0 %422
      %426 = vset.pattern.permute.xlu0 0
      %427 = vperm.xlu0 %426, %v304
      %v428 = vpop.permute.xlu0 %427
      %431 = vset.pattern.permute.xlu0 0
      %432 = vperm.xlu0 %431, %v305
      %v433 = vpop.permute.xlu0 %432
      %436 = vset.pattern.permute.xlu0 0
      %437 = vperm.xlu0 %436, %v306
      %v438 = vpop.permute.xlu0 %437
      %441 = vset.pattern.permute.xlu0 0
      %442 = vperm.xlu0 %441, %v307
      %v443 = vpop.permute.xlu0 %442
      %446 = vset.pattern.permute.xlu0 0
      %447 = vperm.xlu0 %446, %v308
      %v448 = vpop.permute.xlu0 %447
      %451 = vset.pattern.permute.xlu0 0
      %452 = vperm.xlu0 %451, %v309
      %v453 = vpop.permute.xlu0 %452
      %456 = vset.pattern.permute.xlu0 0
      %457 = vperm.xlu0 %456, %v310
      %v458 = vpop.permute.xlu0 %457
      %461 = vset.pattern.permute.xlu0 0
      %462 = vperm.xlu0 %461, %v311
      %v463 = vpop.permute.xlu0 %462
      %466 = vset.pattern.permute.xlu0 0
      %467 = vperm.xlu0 %466, %v312
      %v468 = vpop.permute.xlu0 %467
      %471 = vset.pattern.permute.xlu0 0
      %472 = vperm.xlu0 %471, %v313
      %v473 = vpop.permute.xlu0 %472
      %v476 = vlaneseq
      %v477 = vshrl.u32 %v476, 7
      %v478 = vsub.s32 0, %v477
      %v479 = vrot.slane %v314, %v478
      %v480 = vlaneseq
      %v481 = vshrl.u32 %v480, 7
      %v482 = vsub.s32 2, %v481
      %v483 = vrot.slane %v314, %v482
      %v486 = vlaneseq
      %v487 = vshrl.u32 %v486, 7
      %v488 = vsub.s32 0, %v487
      %v489 = vrot.slane %v479, %v488
      %v490 = vlaneseq
      %v491 = vshrl.u32 %v490, 7
      %v492 = vsub.s32 0, %v491
      %v493 = vrot.slane %v483, %v492
      %v494 = vmul.f32 %v318, %v489
      %v495 = vmul.f32 %v318, %v493
      %v496 = vmul.f32 %v323, %v489
      %v497 = vmul.f32 %v323, %v493
      %v498 = vmul.f32 %v328, %v489
      %v499 = vmul.f32 %v328, %v493
      %v500 = vmul.f32 %v333, %v489
      %v501 = vmul.f32 %v333, %v493
      %v502 = vmul.f32 %v338, %v489
      %v503 = vmul.f32 %v338, %v493
      %v504 = vmul.f32 %v343, %v489
      %v505 = vmul.f32 %v343, %v493
      %v506 = vmul.f32 %v348, %v489
      %v507 = vmul.f32 %v348, %v493
      %v508 = vmul.f32 %v353, %v489
      %v509 = vmul.f32 %v353, %v493
      %v510 = vmul.f32 %v358, %v489
      %v511 = vmul.f32 %v358, %v493
      %v512 = vmul.f32 %v363, %v489
      %v513 = vmul.f32 %v363, %v493
      %v514 = vmul.f32 %v368, %v489
      %v515 = vmul.f32 %v368, %v493
      %v516 = vmul.f32 %v373, %v489
      %v517 = vmul.f32 %v373, %v493
      %v518 = vmul.f32 %v378, %v489
      %v519 = vmul.f32 %v378, %v493
      %v520 = vmul.f32 %v383, %v489
      %v521 = vmul.f32 %v383, %v493
      %v522 = vmul.f32 %v388, %v489
      %v523 = vmul.f32 %v388, %v493
      %v524 = vmul.f32 %v393, %v489
      %v525 = vmul.f32 %v393, %v493
      %v526 = vmul.f32 %v398, %v489
      %v527 = vmul.f32 %v398, %v493
      %v528 = vmul.f32 %v403, %v489
      %v529 = vmul.f32 %v403, %v493
      %v530 = vmul.f32 %v408, %v489
      %v531 = vmul.f32 %v408, %v493
      %v532 = vmul.f32 %v413, %v489
      %v533 = vmul.f32 %v413, %v493
      %v534 = vmul.f32 %v418, %v489
      %v535 = vmul.f32 %v418, %v493
      %v536 = vmul.f32 %v423, %v489
      %v537 = vmul.f32 %v423, %v493
      %v538 = vmul.f32 %v428, %v489
      %v539 = vmul.f32 %v428, %v493
      %v540 = vmul.f32 %v433, %v489
      %v541 = vmul.f32 %v433, %v493
      %v542 = vmul.f32 %v438, %v489
      %v543 = vmul.f32 %v438, %v493
      %v544 = vmul.f32 %v443, %v489
      %v545 = vmul.f32 %v443, %v493
      %v546 = vmul.f32 %v448, %v489
      %v547 = vmul.f32 %v448, %v493
      %v548 = vmul.f32 %v453, %v489
      %v549 = vmul.f32 %v453, %v493
      %v550 = vmul.f32 %v458, %v489
      %v551 = vmul.f32 %v458, %v493
      %v552 = vmul.f32 %v463, %v489
      %v553 = vmul.f32 %v463, %v493
      %v554 = vmul.f32 %v468, %v489
      %v555 = vmul.f32 %v468, %v493
      %v556 = vmul.f32 %v473, %v489
      %v557 = vmul.f32 %v473, %v493
      %558 = vset.pattern.permute.xlu0 1
      %559 = vperm.xlu0 %558, %v282
      %v560 = vpop.permute.xlu0 %559
      %562 = vset.pattern.permute.xlu0 1
      %563 = vperm.xlu0 %562, %v283
      %v564 = vpop.permute.xlu0 %563
      %566 = vset.pattern.permute.xlu0 1
      %567 = vperm.xlu0 %566, %v284
      %v568 = vpop.permute.xlu0 %567
      %570 = vset.pattern.permute.xlu0 1
      %571 = vperm.xlu0 %570, %v285
      %v572 = vpop.permute.xlu0 %571
      %574 = vset.pattern.permute.xlu0 1
      %575 = vperm.xlu0 %574, %v286
      %v576 = vpop.permute.xlu0 %575
      %578 = vset.pattern.permute.xlu0 1
      %579 = vperm.xlu0 %578, %v287
      %v580 = vpop.permute.xlu0 %579
      %582 = vset.pattern.permute.xlu0 1
      %583 = vperm.xlu0 %582, %v288
      %v584 = vpop.permute.xlu0 %583
      %586 = vset.pattern.permute.xlu0 1
      %587 = vperm.xlu0 %586, %v289
      %v588 = vpop.permute.xlu0 %587
      %590 = vset.pattern.permute.xlu0 1
      %591 = vperm.xlu0 %590, %v290
      %v592 = vpop.permute.xlu0 %591
      %594 = vset.pattern.permute.xlu0 1
      %595 = vperm.xlu0 %594, %v291
      %v596 = vpop.permute.xlu0 %595
      %598 = vset.pattern.permute.xlu0 1
      %599 = vperm.xlu0 %598, %v292
      %v600 = vpop.permute.xlu0 %599
      %602 = vset.pattern.permute.xlu0 1
      %603 = vperm.xlu0 %602, %v293
      %v604 = vpop.permute.xlu0 %603
      %606 = vset.pattern.permute.xlu0 1
      %607 = vperm.xlu0 %606, %v294
      %v608 = vpop.permute.xlu0 %607
      %610 = vset.pattern.permute.xlu0 1
      %611 = vperm.xlu0 %610, %v295
      %v612 = vpop.permute.xlu0 %611
      %614 = vset.pattern.permute.xlu0 1
      %615 = vperm.xlu0 %614, %v296
      %v616 = vpop.permute.xlu0 %615
      %618 = vset.pattern.permute.xlu0 1
      %619 = vperm.xlu0 %618, %v297
      %v620 = vpop.permute.xlu0 %619
      %622 = vset.pattern.permute.xlu0 1
      %623 = vperm.xlu0 %622, %v298
      %v624 = vpop.permute.xlu0 %623
      %626 = vset.pattern.permute.xlu0 1
      %627 = vperm.xlu0 %626, %v299
      %v628 = vpop.permute.xlu0 %627
      %630 = vset.pattern.permute.xlu0 1
      %631 = vperm.xlu0 %630, %v300
      %v632 = vpop.permute.xlu0 %631
      %634 = vset.pattern.permute.xlu0 1
      %635 = vperm.xlu0 %634, %v301
      %v636 = vpop.permute.xlu0 %635
      %638 = vset.pattern.permute.xlu0 1
      %639 = vperm.xlu0 %638, %v302
      %v640 = vpop.permute.xlu0 %639
      %642 = vset.pattern.permute.xlu0 1
      %643 = vperm.xlu0 %642, %v303
      %v644 = vpop.permute.xlu0 %643
      %646 = vset.pattern.permute.xlu0 1
      %647 = vperm.xlu0 %646, %v304
      %v648 = vpop.permute.xlu0 %647
      %650 = vset.pattern.permute.xlu0 1
      %651 = vperm.xlu0 %650, %v305
      %v652 = vpop.permute.xlu0 %651
      %654 = vset.pattern.permute.xlu0 1
      %655 = vperm.xlu0 %654, %v306
      %v656 = vpop.permute.xlu0 %655
      %658 = vset.pattern.permute.xlu0 1
      %659 = vperm.xlu0 %658, %v307
      %v660 = vpop.permute.xlu0 %659
      %662 = vset.pattern.permute.xlu0 1
      %663 = vperm.xlu0 %662, %v308
      %v664 = vpop.permute.xlu0 %663
      %666 = vset.pattern.permute.xlu0 1
      %667 = vperm.xlu0 %666, %v309
      %v668 = vpop.permute.xlu0 %667
      %670 = vset.pattern.permute.xlu0 1
      %671 = vperm.xlu0 %670, %v310
      %v672 = vpop.permute.xlu0 %671
      %674 = vset.pattern.permute.xlu0 1
      %675 = vperm.xlu0 %674, %v311
      %v676 = vpop.permute.xlu0 %675
      %678 = vset.pattern.permute.xlu0 1
      %679 = vperm.xlu0 %678, %v312
      %v680 = vpop.permute.xlu0 %679
      %682 = vset.pattern.permute.xlu0 1
      %683 = vperm.xlu0 %682, %v313
      %v684 = vpop.permute.xlu0 %683
      %v686 = vlaneseq
      %v687 = vshrl.u32 %v686, 7
      %v688 = vsub.s32 1, %v687
      %v689 = vrot.slane %v314, %v688
      %v690 = vlaneseq
      %v691 = vshrl.u32 %v690, 7
      %v692 = vsub.s32 3, %v691
      %v693 = vrot.slane %v314, %v692
      %v696 = vlaneseq
      %v697 = vshrl.u32 %v696, 7
      %v698 = vsub.s32 1, %v697
      %v699 = vrot.slane %v689, %v698
      %v700 = vlaneseq
      %v701 = vshrl.u32 %v700, 7
      %v702 = vsub.s32 1, %v701
      %v703 = vrot.slane %v693, %v702
      %v704 = vmul.f32 %v560, %v699
      %v705 = vmul.f32 %v560, %v703
      %v706 = vmul.f32 %v564, %v699
      %v707 = vmul.f32 %v564, %v703
      %v708 = vmul.f32 %v568, %v699
      %v709 = vmul.f32 %v568, %v703
      %v710 = vmul.f32 %v572, %v699
      %v711 = vmul.f32 %v572, %v703
      %v712 = vmul.f32 %v576, %v699
      %v713 = vmul.f32 %v576, %v703
      %v714 = vmul.f32 %v580, %v699
      %v715 = vmul.f32 %v580, %v703
      %v716 = vmul.f32 %v584, %v699
      %v717 = vmul.f32 %v584, %v703
      %v718 = vmul.f32 %v588, %v699
      %v719 = vmul.f32 %v588, %v703
      %v720 = vmul.f32 %v592, %v699
      %v721 = vmul.f32 %v592, %v703
      %v722 = vmul.f32 %v596, %v699
      %v723 = vmul.f32 %v596, %v703
      %v724 = vmul.f32 %v600, %v699
      %v725 = vmul.f32 %v600, %v703
      %v726 = vmul.f32 %v604, %v699
      %v727 = vmul.f32 %v604, %v703
      %v728 = vmul.f32 %v608, %v699
      %v729 = vmul.f32 %v608, %v703
      %v730 = vmul.f32 %v612, %v699
      %v731 = vmul.f32 %v612, %v703
      %v732 = vmul.f32 %v616, %v699
      %v733 = vmul.f32 %v616, %v703
      %v734 = vmul.f32 %v620, %v699
      %v735 = vmul.f32 %v620, %v703
      %v736 = vmul.f32 %v624, %v699
      %v737 = vmul.f32 %v624, %v703
      %v738 = vmul.f32 %v628, %v699
      %v739 = vmul.f32 %v628, %v703
      %v740 = vmul.f32 %v632, %v699
      %v741 = vmul.f32 %v632, %v703
      %v742 = vmul.f32 %v636, %v699
      %v743 = vmul.f32 %v636, %v703
      %v744 = vmul.f32 %v640, %v699
      %v745 = vmul.f32 %v640, %v703
      %v746 = vmul.f32 %v644, %v699
      %v747 = vmul.f32 %v644, %v703
      %v748 = vmul.f32 %v648, %v699
      %v749 = vmul.f32 %v648, %v703
      %v750 = vmul.f32 %v652, %v699
      %v751 = vmul.f32 %v652, %v703
      %v752 = vmul.f32 %v656, %v699
      %v753 = vmul.f32 %v656, %v703
      %v754 = vmul.f32 %v660, %v699
      %v755 = vmul.f32 %v660, %v703
      %v756 = vmul.f32 %v664, %v699
      %v757 = vmul.f32 %v664, %v703
      %v758 = vmul.f32 %v668, %v699
      %v759 = vmul.f32 %v668, %v703
      %v760 = vmul.f32 %v672, %v699
      %v761 = vmul.f32 %v672, %v703
      %v762 = vmul.f32 %v676, %v699
      %v763 = vmul.f32 %v676, %v703
      %v764 = vmul.f32 %v680, %v699
      %v765 = vmul.f32 %v680, %v703
      %v766 = vmul.f32 %v684, %v699
      %v767 = vmul.f32 %v684, %v703
      %v768 = vadd.f32 %v494, %v704
      %v769 = vadd.f32 %v495, %v705
      %v770 = vadd.f32 %v496, %v706
      %v771 = vadd.f32 %v497, %v707
      %v772 = vadd.f32 %v498, %v708
      %v773 = vadd.f32 %v499, %v709
      %v774 = vadd.f32 %v500, %v710
      %v775 = vadd.f32 %v501, %v711
      %v776 = vadd.f32 %v502, %v712
      %v777 = vadd.f32 %v503, %v713
      %v778 = vadd.f32 %v504, %v714
      %v779 = vadd.f32 %v505, %v715
      %v780 = vadd.f32 %v506, %v716
      %v781 = vadd.f32 %v507, %v717
      %v782 = vadd.f32 %v508, %v718
      %v783 = vadd.f32 %v509, %v719
      %v784 = vadd.f32 %v510, %v720
      %v785 = vadd.f32 %v511, %v721
      %v786 = vadd.f32 %v512, %v722
      %v787 = vadd.f32 %v513, %v723
      %v788 = vadd.f32 %v514, %v724
      %v789 = vadd.f32 %v515, %v725
      %v790 = vadd.f32 %v516, %v726
      %v791 = vadd.f32 %v517, %v727
      %v792 = vadd.f32 %v518, %v728
      %v793 = vadd.f32 %v519, %v729
      %v794 = vadd.f32 %v520, %v730
      %v795 = vadd.f32 %v521, %v731
      %v796 = vadd.f32 %v522, %v732
      %v797 = vadd.f32 %v523, %v733
      %v798 = vadd.f32 %v524, %v734
      %v799 = vadd.f32 %v525, %v735
      %v800 = vadd.f32 %v526, %v736
      %v801 = vadd.f32 %v527, %v737
      %v802 = vadd.f32 %v528, %v738
      %v803 = vadd.f32 %v529, %v739
      %v804 = vadd.f32 %v530, %v740
      %v805 = vadd.f32 %v531, %v741
      %v806 = vadd.f32 %v532, %v742
      %v807 = vadd.f32 %v533, %v743
      %v808 = vadd.f32 %v534, %v744
      %v809 = vadd.f32 %v535, %v745
      %v810 = vadd.f32 %v536, %v746
      %v811 = vadd.f32 %v537, %v747
      %v812 = vadd.f32 %v538, %v748
      %v813 = vadd.f32 %v539, %v749
      %v814 = vadd.f32 %v540, %v750
      %v815 = vadd.f32 %v541, %v751
      %v816 = vadd.f32 %v542, %v752
      %v817 = vadd.f32 %v543, %v753
      %v818 = vadd.f32 %v544, %v754
      %v819 = vadd.f32 %v545, %v755
      %v820 = vadd.f32 %v546, %v756
      %v821 = vadd.f32 %v547, %v757
      %v822 = vadd.f32 %v548, %v758
      %v823 = vadd.f32 %v549, %v759
      %v824 = vadd.f32 %v550, %v760
      %v825 = vadd.f32 %v551, %v761
      %v826 = vadd.f32 %v552, %v762
      %v827 = vadd.f32 %v553, %v763
      %v828 = vadd.f32 %v554, %v764
      %v829 = vadd.f32 %v555, %v765
      %v830 = vadd.f32 %v556, %v766
      %v831 = vadd.f32 %v557, %v767
      %v832 = vld [vmem:[%s2] sm:$0x3]
      %v834 = vlaneseq
      %v835 = vshrl.u32 %v834, 7
      %v836 = vsub.s32 0, %v835
      %v837 = vrot.slane %v832, %v836
      %v838 = vlaneseq
      %v839 = vshrl.u32 %v838, 7
      %v840 = vsub.s32 1, %v839
      %v841 = vrot.slane %v832, %v840
      %v844 = vadd.f32 %v768, %v837
      %v845 = vadd.f32 %v769, %v841
      %v846 = vadd.f32 %v770, %v837
      %v847 = vadd.f32 %v771, %v841
      %v848 = vadd.f32 %v772, %v837
      %v849 = vadd.f32 %v773, %v841
      %v850 = vadd.f32 %v774, %v837
      %v851 = vadd.f32 %v775, %v841
      %v852 = vadd.f32 %v776, %v837
      %v853 = vadd.f32 %v777, %v841
      %v854 = vadd.f32 %v778, %v837
      %v855 = vadd.f32 %v779, %v841
      %v856 = vadd.f32 %v780, %v837
      %v857 = vadd.f32 %v781, %v841
      %v858 = vadd.f32 %v782, %v837
      %v859 = vadd.f32 %v783, %v841
      %v860 = vadd.f32 %v784, %v837
      %v861 = vadd.f32 %v785, %v841
      %v862 = vadd.f32 %v786, %v837
      %v863 = vadd.f32 %v787, %v841
      %v864 = vadd.f32 %v788, %v837
      %v865 = vadd.f32 %v789, %v841
      %v866 = vadd.f32 %v790, %v837
      %v867 = vadd.f32 %v791, %v841
      %v868 = vadd.f32 %v792, %v837
      %v869 = vadd.f32 %v793, %v841
      %v870 = vadd.f32 %v794, %v837
      %v871 = vadd.f32 %v795, %v841
      %v872 = vadd.f32 %v796, %v837
      %v873 = vadd.f32 %v797, %v841
      %v874 = vadd.f32 %v798, %v837
      %v875 = vadd.f32 %v799, %v841
      %v876 = vadd.f32 %v800, %v837
      %v877 = vadd.f32 %v801, %v841
      %v878 = vadd.f32 %v802, %v837
      %v879 = vadd.f32 %v803, %v841
      %v880 = vadd.f32 %v804, %v837
      %v881 = vadd.f32 %v805, %v841
      %v882 = vadd.f32 %v806, %v837
      %v883 = vadd.f32 %v807, %v841
      %v884 = vadd.f32 %v808, %v837
      %v885 = vadd.f32 %v809, %v841
      %v886 = vadd.f32 %v810, %v837
      %v887 = vadd.f32 %v811, %v841
      %v888 = vadd.f32 %v812, %v837
      %v889 = vadd.f32 %v813, %v841
      %v890 = vadd.f32 %v814, %v837
      %v891 = vadd.f32 %v815, %v841
      %v892 = vadd.f32 %v816, %v837
      %v893 = vadd.f32 %v817, %v841
      %v894 = vadd.f32 %v818, %v837
      %v895 = vadd.f32 %v819, %v841
      %v896 = vadd.f32 %v820, %v837
      %v897 = vadd.f32 %v821, %v841
      %v898 = vadd.f32 %v822, %v837
      %v899 = vadd.f32 %v823, %v841
      %v900 = vadd.f32 %v824, %v837
      %v901 = vadd.f32 %v825, %v841
      %v902 = vadd.f32 %v826, %v837
      %v903 = vadd.f32 %v827, %v841
      %v904 = vadd.f32 %v828, %v837
      %v905 = vadd.f32 %v829, %v841
      %v906 = vadd.f32 %v830, %v837
      %v907 = vadd.f32 %v831, %v841
      %v908 = vmul.f32 %v844, 0.2
      %v909 = vmul.f32 %v845, 0.2
      %v910 = vmul.f32 %v846, 0.2
      %v911 = vmul.f32 %v847, 0.2
      %v912 = vmul.f32 %v848, 0.2
      %v913 = vmul.f32 %v849, 0.2
      %v914 = vmul.f32 %v850, 0.2
      %v915 = vmul.f32 %v851, 0.2
      %v916 = vmul.f32 %v852, 0.2
      %v917 = vmul.f32 %v853, 0.2
      %v918 = vmul.f32 %v854, 0.2
      %v919 = vmul.f32 %v855, 0.2
      %v920 = vmul.f32 %v856, 0.2
      %v921 = vmul.f32 %v857, 0.2
      %v922 = vmul.f32 %v858, 0.2
      %v923 = vmul.f32 %v859, 0.2
      %v924 = vmul.f32 %v860, 0.2
      %v925 = vmul.f32 %v861, 0.2
      %v926 = vmul.f32 %v862, 0.2
      %v927 = vmul.f32 %v863, 0.2
      %v928 = vmul.f32 %v864, 0.2
      %v929 = vmul.f32 %v865, 0.2
      %v930 = vmul.f32 %v866, 0.2
      %v931 = vmul.f32 %v867, 0.2
      %v932 = vmul.f32 %v868, 0.2
      %v933 = vmul.f32 %v869, 0.2
      %v934 = vmul.f32 %v870, 0.2
      %v935 = vmul.f32 %v871, 0.2
      %v936 = vmul.f32 %v872, 0.2
      %v937 = vmul.f32 %v873, 0.2
      %v938 = vmul.f32 %v874, 0.2
      %v939 = vmul.f32 %v875, 0.2
      %v940 = vmul.f32 %v876, 0.2
      %v941 = vmul.f32 %v877, 0.2
      %v942 = vmul.f32 %v878, 0.2
      %v943 = vmul.f32 %v879, 0.2
      %v944 = vmul.f32 %v880, 0.2
      %v945 = vmul.f32 %v881, 0.2
      %v946 = vmul.f32 %v882, 0.2
      %v947 = vmul.f32 %v883, 0.2
      %v948 = vmul.f32 %v884, 0.2
      %v949 = vmul.f32 %v885, 0.2
      %v950 = vmul.f32 %v886, 0.2
      %v951 = vmul.f32 %v887, 0.2
      %v952 = vmul.f32 %v888, 0.2
      %v953 = vmul.f32 %v889, 0.2
      %v954 = vmul.f32 %v890, 0.2
      %v955 = vmul.f32 %v891, 0.2
      %v956 = vmul.f32 %v892, 0.2
      %v957 = vmul.f32 %v893, 0.2
      %v958 = vmul.f32 %v894, 0.2
      %v959 = vmul.f32 %v895, 0.2
      %v960 = vmul.f32 %v896, 0.2
      %v961 = vmul.f32 %v897, 0.2
      %v962 = vmul.f32 %v898, 0.2
      %v963 = vmul.f32 %v899, 0.2
      %v964 = vmul.f32 %v900, 0.2
      %v965 = vmul.f32 %v901, 0.2
      %v966 = vmul.f32 %v902, 0.2
      %v967 = vmul.f32 %v903, 0.2
      %v968 = vmul.f32 %v904, 0.2
      %v969 = vmul.f32 %v905, 0.2
      %v970 = vmul.f32 %v906, 0.2
      %v971 = vmul.f32 %v907, 0.2
      %v972 = vmax.f32 %v844, %v908
      %v973 = vmax.f32 %v845, %v909
      %v974 = vmax.f32 %v846, %v910
      %v975 = vmax.f32 %v847, %v911
      %v976 = vmax.f32 %v848, %v912
      %v977 = vmax.f32 %v849, %v913
      %v978 = vmax.f32 %v850, %v914
      %v979 = vmax.f32 %v851, %v915
      %v980 = vmax.f32 %v852, %v916
      %v981 = vmax.f32 %v853, %v917
      %v982 = vmax.f32 %v854, %v918
      %v983 = vmax.f32 %v855, %v919
      %v984 = vmax.f32 %v856, %v920
      %v985 = vmax.f32 %v857, %v921
      %v986 = vmax.f32 %v858, %v922
      %v987 = vmax.f32 %v859, %v923
      %v988 = vmax.f32 %v860, %v924
      %v989 = vmax.f32 %v861, %v925
      %v990 = vmax.f32 %v862, %v926
      %v991 = vmax.f32 %v863, %v927
      %v992 = vmax.f32 %v864, %v928
      %v993 = vmax.f32 %v865, %v929
      %v994 = vmax.f32 %v866, %v930
      %v995 = vmax.f32 %v867, %v931
      %v996 = vmax.f32 %v868, %v932
      %v997 = vmax.f32 %v869, %v933
      %v998 = vmax.f32 %v870, %v934
      %v999 = vmax.f32 %v871, %v935
      %v1000 = vmax.f32 %v872, %v936
      %v1001 = vmax.f32 %v873, %v937
      %v1002 = vmax.f32 %v874, %v938
      %v1003 = vmax.f32 %v875, %v939
      %v1004 = vmax.f32 %v876, %v940
      %v1005 = vmax.f32 %v877, %v941
      %v1006 = vmax.f32 %v878, %v942
      %v1007 = vmax.f32 %v879, %v943
      %v1008 = vmax.f32 %v880, %v944
      %v1009 = vmax.f32 %v881, %v945
      %v1010 = vmax.f32 %v882, %v946
      %v1011 = vmax.f32 %v883, %v947
      %v1012 = vmax.f32 %v884, %v948
      %v1013 = vmax.f32 %v885, %v949
      %v1014 = vmax.f32 %v886, %v950
      %v1015 = vmax.f32 %v887, %v951
      %v1016 = vmax.f32 %v888, %v952
      %v1017 = vmax.f32 %v889, %v953
      %v1018 = vmax.f32 %v890, %v954
      %v1019 = vmax.f32 %v891, %v955
      %v1020 = vmax.f32 %v892, %v956
      %v1021 = vmax.f32 %v893, %v957
      %v1022 = vmax.f32 %v894, %v958
      %v1023 = vmax.f32 %v895, %v959
      %v1024 = vmax.f32 %v896, %v960
      %v1025 = vmax.f32 %v897, %v961
      %v1026 = vmax.f32 %v898, %v962
      %v1027 = vmax.f32 %v899, %v963
      %v1028 = vmax.f32 %v900, %v964
      %v1029 = vmax.f32 %v901, %v965
      %v1030 = vmax.f32 %v902, %v966
      %v1031 = vmax.f32 %v903, %v967
      %v1032 = vmax.f32 %v904, %v968
      %v1033 = vmax.f32 %v905, %v969
      %v1034 = vmax.f32 %v906, %v970
      %v1035 = vmax.f32 %v907, %v971
      %v1036 = vpack.c.bf16 %v974, %v972
      %v1037 = vpack.c.bf16 %v975, %v973
      %v1038 = vpack.c.bf16 %v978, %v976
      %v1039 = vpack.c.bf16 %v979, %v977
      %v1040 = vpack.c.bf16 %v982, %v980
      %v1041 = vpack.c.bf16 %v983, %v981
      %v1042 = vpack.c.bf16 %v986, %v984
      %v1043 = vpack.c.bf16 %v987, %v985
      %v1044 = vpack.c.bf16 %v990, %v988
      %v1045 = vpack.c.bf16 %v991, %v989
      %v1046 = vpack.c.bf16 %v994, %v992
      %v1047 = vpack.c.bf16 %v995, %v993
      %v1048 = vpack.c.bf16 %v998, %v996
      %v1049 = vpack.c.bf16 %v999, %v997
      %v1050 = vpack.c.bf16 %v1002, %v1000
      %v1051 = vpack.c.bf16 %v1003, %v1001
      %v1052 = vpack.c.bf16 %v1006, %v1004
      %v1053 = vpack.c.bf16 %v1007, %v1005
      %v1054 = vpack.c.bf16 %v1010, %v1008
      %v1055 = vpack.c.bf16 %v1011, %v1009
      %v1056 = vpack.c.bf16 %v1014, %v1012
      %v1057 = vpack.c.bf16 %v1015, %v1013
      %v1058 = vpack.c.bf16 %v1018, %v1016
      %v1059 = vpack.c.bf16 %v1019, %v1017
      %v1060 = vpack.c.bf16 %v1022, %v1020
      %v1061 = vpack.c.bf16 %v1023, %v1021
      %v1062 = vpack.c.bf16 %v1026, %v1024
      %v1063 = vpack.c.bf16 %v1027, %v1025
      %v1064 = vpack.c.bf16 %v1030, %v1028
      %v1065 = vpack.c.bf16 %v1031, %v1029
      %v1066 = vpack.c.bf16 %v1034, %v1032
      %v1067 = vpack.c.bf16 %v1035, %v1033
      %v1068 = vld [vmem:[%s3] sm:$0xff]
      %v1069 = vld [vmem:[%s3 + $0x8] sm:$0xff]
      %v1070 = vld [vmem:[%s3 + $0x10] sm:$0xff]
      %v1071 = vld [vmem:[%s3 + $0x18] sm:$0xff]
      %v1072 = vld [vmem:[%s3 + $0x20] sm:$0xff]
      %v1073 = vld [vmem:[%s3 + $0x28] sm:$0xff]
      %v1074 = vld [vmem:[%s3 + $0x30] sm:$0xff]
      %v1075 = vld [vmem:[%s3 + $0x38] sm:$0xff]
      %v1076 = vld [vmem:[%s3 + $0x40] sm:$0xff]
      %v1077 = vld [vmem:[%s3 + $0x48] sm:$0xff]
      %v1078 = vld [vmem:[%s3 + $0x50] sm:$0xff]
      %v1079 = vld [vmem:[%s3 + $0x58] sm:$0xff]
      %v1080 = vld [vmem:[%s3 + $0x60] sm:$0xff]
      %v1081 = vld [vmem:[%s3 + $0x68] sm:$0xff]
      %v1082 = vld [vmem:[%s3 + $0x70] sm:$0xff]
      %v1083 = vld [vmem:[%s3 + $0x78] sm:$0xff]
      %v1084 = vld [vmem:[%s3 + $0x80] sm:$0xff]
      %v1085 = vld [vmem:[%s3 + $0x88] sm:$0xff]
      %v1086 = vld [vmem:[%s3 + $0x90] sm:$0xff]
      %v1087 = vld [vmem:[%s3 + $0x98] sm:$0xff]
      %v1088 = vld [vmem:[%s3 + $0xa0] sm:$0xff]
      %v1089 = vld [vmem:[%s3 + $0xa8] sm:$0xff]
      %v1090 = vld [vmem:[%s3 + $0xb0] sm:$0xff]
      %v1091 = vld [vmem:[%s3 + $0xb8] sm:$0xff]
      %v1092 = vld [vmem:[%s3 + $0xc0] sm:$0xff]
      %v1093 = vld [vmem:[%s3 + $0xc8] sm:$0xff]
      %v1094 = vld [vmem:[%s3 + $0xd0] sm:$0xff]
      %v1095 = vld [vmem:[%s3 + $0xd8] sm:$0xff]
      %v1096 = vld [vmem:[%s3 + $0xe0] sm:$0xff]
      %v1097 = vld [vmem:[%s3 + $0xe8] sm:$0xff]
      %v1098 = vld [vmem:[%s3 + $0xf0] sm:$0xff]
      %v1099 = vld [vmem:[%s3 + $0xf8] sm:$0xff]
      %v1100 = vld [vmem:[%s4] sm:$0x3]
      %v1102 = vlaneseq
      %v1103 = vshrl.u32 %v1102, 7
      %v1104 = vsub.s32 0, %v1103
      %v1105 = vrot.slane %v1100, %v1104
      %v1106 = vlaneseq
      %v1107 = vshrl.u32 %v1106, 7
      %v1108 = vsub.s32 1, %v1107
      %v1109 = vrot.slane %v1100, %v1108
      %v1144 = vunpack.c.l.b16 %v1068
      %v1145 = vunpack.c.h.b16 %v1068
      %v1146 = vunpack.c.l.b16 %v1069
      %v1147 = vunpack.c.h.b16 %v1069
      %v1148 = vunpack.c.l.b16 %v1070
      %v1149 = vunpack.c.h.b16 %v1070
      %v1150 = vunpack.c.l.b16 %v1071
      %v1151 = vunpack.c.h.b16 %v1071
      %v1152 = vunpack.c.l.b16 %v1072
      %v1153 = vunpack.c.h.b16 %v1072
      %v1154 = vunpack.c.l.b16 %v1073
      %v1155 = vunpack.c.h.b16 %v1073
      %v1156 = vunpack.c.l.b16 %v1074
      %v1157 = vunpack.c.h.b16 %v1074
      %v1158 = vunpack.c.l.b16 %v1075
      %v1159 = vunpack.c.h.b16 %v1075
      %v1160 = vunpack.c.l.b16 %v1076
      %v1161 = vunpack.c.h.b16 %v1076
      %v1162 = vunpack.c.l.b16 %v1077
      %v1163 = vunpack.c.h.b16 %v1077
      %v1164 = vunpack.c.l.b16 %v1078
      %v1165 = vunpack.c.h.b16 %v1078
      %v1166 = vunpack.c.l.b16 %v1079
      %v1167 = vunpack.c.h.b16 %v1079
      %v1168 = vunpack.c.l.b16 %v1080
      %v1169 = vunpack.c.h.b16 %v1080
      %v1170 = vunpack.c.l.b16 %v1081
      %v1171 = vunpack.c.h.b16 %v1081
      %v1172 = vunpack.c.l.b16 %v1082
      %v1173 = vunpack.c.h.b16 %v1082
      %v1174 = vunpack.c.l.b16 %v1083
      %v1175 = vunpack.c.h.b16 %v1083
      %v1176 = vunpack.c.l.b16 %v1084
      %v1177 = vunpack.c.h.b16 %v1084
      %v1178 = vunpack.c.l.b16 %v1085
      %v1179 = vunpack.c.h.b16 %v1085
      %v1180 = vunpack.c.l.b16 %v1086
      %v1181 = vunpack.c.h.b16 %v1086
      %v1182 = vunpack.c.l.b16 %v1087
      %v1183 = vunpack.c.h.b16 %v1087
      %v1184 = vunpack.c.l.b16 %v1088
      %v1185 = vunpack.c.h.b16 %v1088
      %v1186 = vunpack.c.l.b16 %v1089
      %v1187 = vunpack.c.h.b16 %v1089
      %v1188 = vunpack.c.l.b16 %v1090
      %v1189 = vunpack.c.h.b16 %v1090
      %v1190 = vunpack.c.l.b16 %v1091
      %v1191 = vunpack.c.h.b16 %v1091
      %v1192 = vunpack.c.l.b16 %v1092
      %v1193 = vunpack.c.h.b16 %v1092
      %v1194 = vunpack.c.l.b16 %v1093
      %v1195 = vunpack.c.h.b16 %v1093
      %v1196 = vunpack.c.l.b16 %v1094
      %v1197 = vunpack.c.h.b16 %v1094
      %v1198 = vunpack.c.l.b16 %v1095
      %v1199 = vunpack.c.h.b16 %v1095
      %v1200 = vunpack.c.l.b16 %v1096
      %v1201 = vunpack.c.h.b16 %v1096
      %v1202 = vunpack.c.l.b16 %v1097
      %v1203 = vunpack.c.h.b16 %v1097
      %v1204 = vunpack.c.l.b16 %v1098
      %v1205 = vunpack.c.h.b16 %v1098
      %v1206 = vunpack.c.l.b16 %v1099
      %v1207 = vunpack.c.h.b16 %v1099
      %v1208 = vpack.c.b16 %v1146, %v1144
      %v1209 = vpack.c.b16 %v1147, %v1145
      %v1210 = vpack.c.b16 %v1150, %v1148
      %v1211 = vpack.c.b16 %v1151, %v1149
      %v1212 = vpack.c.b16 %v1154, %v1152
      %v1213 = vpack.c.b16 %v1155, %v1153
      %v1214 = vpack.c.b16 %v1158, %v1156
      %v1215 = vpack.c.b16 %v1159, %v1157
      %v1216 = vpack.c.b16 %v1162, %v1160
      %v1217 = vpack.c.b16 %v1163, %v1161
      %v1218 = vpack.c.b16 %v1166, %v1164
      %v1219 = vpack.c.b16 %v1167, %v1165
      %v1220 = vpack.c.b16 %v1170, %v1168
      %v1221 = vpack.c.b16 %v1171, %v1169
      %v1222 = vpack.c.b16 %v1174, %v1172
      %v1223 = vpack.c.b16 %v1175, %v1173
      %v1224 = vpack.c.b16 %v1178, %v1176
      %v1225 = vpack.c.b16 %v1179, %v1177
      %v1226 = vpack.c.b16 %v1182, %v1180
      %v1227 = vpack.c.b16 %v1183, %v1181
      %v1228 = vpack.c.b16 %v1186, %v1184
      %v1229 = vpack.c.b16 %v1187, %v1185
      %v1230 = vpack.c.b16 %v1190, %v1188
      %v1231 = vpack.c.b16 %v1191, %v1189
      %v1232 = vpack.c.b16 %v1194, %v1192
      %v1233 = vpack.c.b16 %v1195, %v1193
      %v1234 = vpack.c.b16 %v1198, %v1196
      %v1235 = vpack.c.b16 %v1199, %v1197
      %v1236 = vpack.c.b16 %v1202, %v1200
      %v1237 = vpack.c.b16 %v1203, %v1201
      %v1238 = vpack.c.b16 %v1206, %v1204
      %v1239 = vpack.c.b16 %v1207, %v1205
      %1272 = vmatprep.subr.bf16.mxu0 %v1223
      %1273 = vmatpush1.bf16.msra.mxu0 %v1222
      %1274 = vmatprep.subr.bf16.mxu0 %v1221
      %1275 = vmatpush1.bf16.msra.mxu0 %v1220
      %1276 = vmatprep.subr.bf16.mxu0 %v1219
      %1277 = vmatpush1.bf16.msra.mxu0 %v1218
      %1278 = vmatprep.subr.bf16.mxu0 %v1217
      %1279 = vmatpush1.bf16.msra.mxu0 %v1216
      %1280 = vmatprep.subr.bf16.mxu0 %v1215
      %1281 = vmatpush1.bf16.msra.mxu0 %v1214
      %1282 = vmatprep.subr.bf16.mxu0 %v1213
      %1283 = vmatpush1.bf16.msra.mxu0 %v1212
      %1284 = vmatprep.subr.bf16.mxu0 %v1211
      %1285 = vmatpush1.bf16.msra.mxu0 %v1210
      %1286 = vmatprep.subr.bf16.mxu0 %v1209
      %1287 = vmatpush1.bf16.msra.mxu0 %v1208
      %1288 = vmatprep.subr.bf16.mxu0 %v1239
      %1289 = vmatpush2.bf16.msra.mxu0 %v1238
      %1290 = vmatprep.subr.bf16.mxu0 %v1237
      %1291 = vmatpush2.bf16.msra.mxu0 %v1236
      %1292 = vmatprep.subr.bf16.mxu0 %v1235
      %1293 = vmatpush2.bf16.msra.mxu0 %v1234
      %1294 = vmatprep.subr.bf16.mxu0 %v1233
      %1295 = vmatpush2.bf16.msra.mxu0 %v1232
      %1296 = vmatprep.subr.bf16.mxu0 %v1231
      %1297 = vmatpush2.bf16.msra.mxu0 %v1230
      %1298 = vmatprep.subr.bf16.mxu0 %v1229
      %1299 = vmatpush2.bf16.msra.mxu0 %v1228
      %1300 = vmatprep.subr.bf16.mxu0 %v1227
      %1301 = vmatpush2.bf16.msra.mxu0 %v1226
      %1302 = vmatprep.subr.bf16.mxu0 %v1225
      %1303 = vmatpush2.bf16.msra.mxu0 %v1224
      %1304 = vmatprep.mubr.bf16.mxu0 %v1037
      %1305 = vmatmul.mubr.bf16.gmra.mxu0 %v1036
      %v1306 = vpop.f32.mrf.mxu0
      %v1307 = vadd.f32 %v1105, %v1306
      %v1308 = vpop.f32.mrf.mxu0
      %v1309 = vadd.f32 %v1109, %v1308
      %v1310 = vpop.f32.mrf.mxu0
      %v1311 = vadd.f32 %v1105, %v1310
      %v1312 = vpop.f32.mrf.mxu0
      %v1313 = vadd.f32 %v1109, %v1312
      %1314 = vmatprep.mubr.bf16.mxu0 %v1039
      %1315 = vmatmul.mubr.bf16.gmra.mxu0 %v1038
      %v1316 = vpop.f32.mrf.mxu0
      %v1317 = vadd.f32 %v1105, %v1316
      %v1318 = vpop.f32.mrf.mxu0
      %v1319 = vadd.f32 %v1109, %v1318
      %v1320 = vpop.f32.mrf.mxu0
      %v1321 = vadd.f32 %v1105, %v1320
      %v1322 = vpop.f32.mrf.mxu0
      %v1323 = vadd.f32 %v1109, %v1322
      %1324 = vmatprep.mubr.bf16.mxu0 %v1041
      %1325 = vmatmul.mubr.bf16.gmra.mxu0 %v1040
      %v1326 = vpop.f32.mrf.mxu0
      %v1327 = vadd.f32 %v1105, %v1326
      %v1328 = vpop.f32.mrf.mxu0
      %v1329 = vadd.f32 %v1109, %v1328
      %v1330 = vpop.f32.mrf.mxu0
      %v1331 = vadd.f32 %v1105, %v1330
      %v1332 = vpop.f32.mrf.mxu0
      %v1333 = vadd.f32 %v1109, %v1332
      %1334 = vmatprep.mubr.bf16.mxu0 %v1043
      %1335 = vmatmul.mubr.bf16.gmra.mxu0 %v1042
      %v1336 = vpop.f32.mrf.mxu0
      %v1337 = vadd.f32 %v1105, %v1336
      %v1338 = vpop.f32.mrf.mxu0
      %v1339 = vadd.f32 %v1109, %v1338
      %v1340 = vpop.f32.mrf.mxu0
      %v1341 = vadd.f32 %v1105, %v1340
      %v1342 = vpop.f32.mrf.mxu0
      %v1343 = vadd.f32 %v1109, %v1342
      %1344 = vmatprep.mubr.bf16.mxu0 %v1045
      %1345 = vmatmul.mubr.bf16.gmra.mxu0 %v1044
      %v1346 = vpop.f32.mrf.mxu0
      %v1347 = vadd.f32 %v1105, %v1346
      %v1348 = vpop.f32.mrf.mxu0
      %v1349 = vadd.f32 %v1109, %v1348
      %v1350 = vpop.f32.mrf.mxu0
      %v1351 = vadd.f32 %v1105, %v1350
      %v1352 = vpop.f32.mrf.mxu0
      %v1353 = vadd.f32 %v1109, %v1352
      %1354 = vmatprep.mubr.bf16.mxu0 %v1047
      %1355 = vmatmul.mubr.bf16.gmra.mxu0 %v1046
      %v1356 = vpop.f32.mrf.mxu0
      %v1357 = vadd.f32 %v1105, %v1356
      %v1358 = vpop.f32.mrf.mxu0
      %v1359 = vadd.f32 %v1109, %v1358
      %v1360 = vpop.f32.mrf.mxu0
      %v1361 = vadd.f32 %v1105, %v1360
      %v1362 = vpop.f32.mrf.mxu0
      %v1363 = vadd.f32 %v1109, %v1362
      %1364 = vmatprep.mubr.bf16.mxu0 %v1049
      %1365 = vmatmul.mubr.bf16.gmra.mxu0 %v1048
      %v1366 = vpop.f32.mrf.mxu0
      %v1367 = vadd.f32 %v1105, %v1366
      %v1368 = vpop.f32.mrf.mxu0
      %v1369 = vadd.f32 %v1109, %v1368
      %v1370 = vpop.f32.mrf.mxu0
      %v1371 = vadd.f32 %v1105, %v1370
      %v1372 = vpop.f32.mrf.mxu0
      %v1373 = vadd.f32 %v1109, %v1372
      %1374 = vmatprep.mubr.bf16.mxu0 %v1051
      %1375 = vmatmul.mubr.bf16.gmra.mxu0 %v1050
      %v1376 = vpop.f32.mrf.mxu0
      %v1377 = vadd.f32 %v1105, %v1376
      %v1378 = vpop.f32.mrf.mxu0
      %v1379 = vadd.f32 %v1109, %v1378
      %v1380 = vpop.f32.mrf.mxu0
      %v1381 = vadd.f32 %v1105, %v1380
      %v1382 = vpop.f32.mrf.mxu0
      %v1383 = vadd.f32 %v1109, %v1382
      %1384 = vmatprep.mubr.bf16.mxu0 %v1053
      %1385 = vmatmul.mubr.bf16.gmra.mxu0 %v1052
      %v1386 = vpop.f32.mrf.mxu0
      %v1387 = vadd.f32 %v1105, %v1386
      %v1388 = vpop.f32.mrf.mxu0
      %v1389 = vadd.f32 %v1109, %v1388
      %v1390 = vpop.f32.mrf.mxu0
      %v1391 = vadd.f32 %v1105, %v1390
      %v1392 = vpop.f32.mrf.mxu0
      %v1393 = vadd.f32 %v1109, %v1392
      %1394 = vmatprep.mubr.bf16.mxu0 %v1055
      %1395 = vmatmul.mubr.bf16.gmra.mxu0 %v1054
      %v1396 = vpop.f32.mrf.mxu0
      %v1397 = vadd.f32 %v1105, %v1396
      %v1398 = vpop.f32.mrf.mxu0
      %v1399 = vadd.f32 %v1109, %v1398
      %v1400 = vpop.f32.mrf.mxu0
      %v1401 = vadd.f32 %v1105, %v1400
      %v1402 = vpop.f32.mrf.mxu0
      %v1403 = vadd.f32 %v1109, %v1402
      %1404 = vmatprep.mubr.bf16.mxu0 %v1057
      %1405 = vmatmul.mubr.bf16.gmra.mxu0 %v1056
      %v1406 = vpop.f32.mrf.mxu0
      %v1407 = vadd.f32 %v1105, %v1406
      %v1408 = vpop.f32.mrf.mxu0
      %v1409 = vadd.f32 %v1109, %v1408
      %v1410 = vpop.f32.mrf.mxu0
      %v1411 = vadd.f32 %v1105, %v1410
      %v1412 = vpop.f32.mrf.mxu0
      %v1413 = vadd.f32 %v1109, %v1412
      %1414 = vmatprep.mubr.bf16.mxu0 %v1059
      %1415 = vmatmul.mubr.bf16.gmra.mxu0 %v1058
      %v1416 = vpop.f32.mrf.mxu0
      %v1417 = vadd.f32 %v1105, %v1416
      %v1418 = vpop.f32.mrf.mxu0
      %v1419 = vadd.f32 %v1109, %v1418
      %v1420 = vpop.f32.mrf.mxu0
      %v1421 = vadd.f32 %v1105, %v1420
      %v1422 = vpop.f32.mrf.mxu0
      %v1423 = vadd.f32 %v1109, %v1422
      %1424 = vmatprep.mubr.bf16.mxu0 %v1061
      %1425 = vmatmul.mubr.bf16.gmra.mxu0 %v1060
      %v1426 = vpop.f32.mrf.mxu0
      %v1427 = vadd.f32 %v1105, %v1426
      %v1428 = vpop.f32.mrf.mxu0
      %v1429 = vadd.f32 %v1109, %v1428
      %v1430 = vpop.f32.mrf.mxu0
      %v1431 = vadd.f32 %v1105, %v1430
      %v1432 = vpop.f32.mrf.mxu0
      %v1433 = vadd.f32 %v1109, %v1432
      %1434 = vmatprep.mubr.bf16.mxu0 %v1063
      %1435 = vmatmul.mubr.bf16.gmra.mxu0 %v1062
      %v1436 = vpop.f32.mrf.mxu0
      %v1437 = vadd.f32 %v1105, %v1436
      %v1438 = vpop.f32.mrf.mxu0
      %v1439 = vadd.f32 %v1109, %v1438
      %v1440 = vpop.f32.mrf.mxu0
      %v1441 = vadd.f32 %v1105, %v1440
      %v1442 = vpop.f32.mrf.mxu0
      %v1443 = vadd.f32 %v1109, %v1442
      %1444 = vmatprep.mubr.bf16.mxu0 %v1065
      %1445 = vmatmul.mubr.bf16.gmra.mxu0 %v1064
      %v1446 = vpop.f32.mrf.mxu0
      %v1447 = vadd.f32 %v1105, %v1446
      %v1448 = vpop.f32.mrf.mxu0
      %v1449 = vadd.f32 %v1109, %v1448
      %v1450 = vpop.f32.mrf.mxu0
      %v1451 = vadd.f32 %v1105, %v1450
      %v1452 = vpop.f32.mrf.mxu0
      %v1453 = vadd.f32 %v1109, %v1452
      %1454 = vmatprep.mubr.bf16.mxu0 %v1067
      %1455 = vmatmul.mubr.bf16.gmra.mxu0 %v1066
      %v1456 = vpop.f32.mrf.mxu0
      %v1457 = vadd.f32 %v1105, %v1456
      %v1458 = vpop.f32.mrf.mxu0
      %v1459 = vadd.f32 %v1109, %v1458
      %v1460 = vpop.f32.mrf.mxu0
      %v1461 = vadd.f32 %v1105, %v1460
      %v1462 = vpop.f32.mrf.mxu0
      %v1463 = vadd.f32 %v1109, %v1462
      %1464 = vdwg.mxu0
      %v1465 = vmul.f32 %v1307, 0.2
      %v1466 = vmul.f32 %v1309, 0.2
      %v1467 = vmul.f32 %v1311, 0.2
      %v1468 = vmul.f32 %v1313, 0.2
      %v1469 = vmul.f32 %v1317, 0.2
      %v1470 = vmul.f32 %v1319, 0.2
      %v1471 = vmul.f32 %v1321, 0.2
      %v1472 = vmul.f32 %v1323, 0.2
      %v1473 = vmul.f32 %v1327, 0.2
      %v1474 = vmul.f32 %v1329, 0.2
      %v1475 = vmul.f32 %v1331, 0.2
      %v1476 = vmul.f32 %v1333, 0.2
      %v1477 = vmul.f32 %v1337, 0.2
      %v1478 = vmul.f32 %v1339, 0.2
      %v1479 = vmul.f32 %v1341, 0.2
      %v1480 = vmul.f32 %v1343, 0.2
      %v1481 = vmul.f32 %v1347, 0.2
      %v1482 = vmul.f32 %v1349, 0.2
      %v1483 = vmul.f32 %v1351, 0.2
      %v1484 = vmul.f32 %v1353, 0.2
      %v1485 = vmul.f32 %v1357, 0.2
      %v1486 = vmul.f32 %v1359, 0.2
      %v1487 = vmul.f32 %v1361, 0.2
      %v1488 = vmul.f32 %v1363, 0.2
      %v1489 = vmul.f32 %v1367, 0.2
      %v1490 = vmul.f32 %v1369, 0.2
      %v1491 = vmul.f32 %v1371, 0.2
      %v1492 = vmul.f32 %v1373, 0.2
      %v1493 = vmul.f32 %v1377, 0.2
      %v1494 = vmul.f32 %v1379, 0.2
      %v1495 = vmul.f32 %v1381, 0.2
      %v1496 = vmul.f32 %v1383, 0.2
      %v1497 = vmul.f32 %v1387, 0.2
      %v1498 = vmul.f32 %v1389, 0.2
      %v1499 = vmul.f32 %v1391, 0.2
      %v1500 = vmul.f32 %v1393, 0.2
      %v1501 = vmul.f32 %v1397, 0.2
      %v1502 = vmul.f32 %v1399, 0.2
      %v1503 = vmul.f32 %v1401, 0.2
      %v1504 = vmul.f32 %v1403, 0.2
      %v1505 = vmul.f32 %v1407, 0.2
      %v1506 = vmul.f32 %v1409, 0.2
      %v1507 = vmul.f32 %v1411, 0.2
      %v1508 = vmul.f32 %v1413, 0.2
      %v1509 = vmul.f32 %v1417, 0.2
      %v1510 = vmul.f32 %v1419, 0.2
      %v1511 = vmul.f32 %v1421, 0.2
      %v1512 = vmul.f32 %v1423, 0.2
      %v1513 = vmul.f32 %v1427, 0.2
      %v1514 = vmul.f32 %v1429, 0.2
      %v1515 = vmul.f32 %v1431, 0.2
      %v1516 = vmul.f32 %v1433, 0.2
      %v1517 = vmul.f32 %v1437, 0.2
      %v1518 = vmul.f32 %v1439, 0.2
      %v1519 = vmul.f32 %v1441, 0.2
      %v1520 = vmul.f32 %v1443, 0.2
      %v1521 = vmul.f32 %v1447, 0.2
      %v1522 = vmul.f32 %v1449, 0.2
      %v1523 = vmul.f32 %v1451, 0.2
      %v1524 = vmul.f32 %v1453, 0.2
      %v1525 = vmul.f32 %v1457, 0.2
      %v1526 = vmul.f32 %v1459, 0.2
      %v1527 = vmul.f32 %v1461, 0.2
      %v1528 = vmul.f32 %v1463, 0.2
      %v1529 = vmax.f32 %v1307, %v1465
      %v1530 = vmax.f32 %v1309, %v1466
      %v1531 = vmax.f32 %v1311, %v1467
      %v1532 = vmax.f32 %v1313, %v1468
      %v1533 = vmax.f32 %v1317, %v1469
      %v1534 = vmax.f32 %v1319, %v1470
      %v1535 = vmax.f32 %v1321, %v1471
      %v1536 = vmax.f32 %v1323, %v1472
      %v1537 = vmax.f32 %v1327, %v1473
      %v1538 = vmax.f32 %v1329, %v1474
      %v1539 = vmax.f32 %v1331, %v1475
      %v1540 = vmax.f32 %v1333, %v1476
      %v1541 = vmax.f32 %v1337, %v1477
      %v1542 = vmax.f32 %v1339, %v1478
      %v1543 = vmax.f32 %v1341, %v1479
      %v1544 = vmax.f32 %v1343, %v1480
      %v1545 = vmax.f32 %v1347, %v1481
      %v1546 = vmax.f32 %v1349, %v1482
      %v1547 = vmax.f32 %v1351, %v1483
      %v1548 = vmax.f32 %v1353, %v1484
      %v1549 = vmax.f32 %v1357, %v1485
      %v1550 = vmax.f32 %v1359, %v1486
      %v1551 = vmax.f32 %v1361, %v1487
      %v1552 = vmax.f32 %v1363, %v1488
      %v1553 = vmax.f32 %v1367, %v1489
      %v1554 = vmax.f32 %v1369, %v1490
      %v1555 = vmax.f32 %v1371, %v1491
      %v1556 = vmax.f32 %v1373, %v1492
      %v1557 = vmax.f32 %v1377, %v1493
      %v1558 = vmax.f32 %v1379, %v1494
      %v1559 = vmax.f32 %v1381, %v1495
      %v1560 = vmax.f32 %v1383, %v1496
      %v1561 = vmax.f32 %v1387, %v1497
      %v1562 = vmax.f32 %v1389, %v1498
      %v1563 = vmax.f32 %v1391, %v1499
      %v1564 = vmax.f32 %v1393, %v1500
      %v1565 = vmax.f32 %v1397, %v1501
      %v1566 = vmax.f32 %v1399, %v1502
      %v1567 = vmax.f32 %v1401, %v1503
      %v1568 = vmax.f32 %v1403, %v1504
      %v1569 = vmax.f32 %v1407, %v1505
      %v1570 = vmax.f32 %v1409, %v1506
      %v1571 = vmax.f32 %v1411, %v1507
      %v1572 = vmax.f32 %v1413, %v1508
      %v1573 = vmax.f32 %v1417, %v1509
      %v1574 = vmax.f32 %v1419, %v1510
      %v1575 = vmax.f32 %v1421, %v1511
      %v1576 = vmax.f32 %v1423, %v1512
      %v1577 = vmax.f32 %v1427, %v1513
      %v1578 = vmax.f32 %v1429, %v1514
      %v1579 = vmax.f32 %v1431, %v1515
      %v1580 = vmax.f32 %v1433, %v1516
      %v1581 = vmax.f32 %v1437, %v1517
      %v1582 = vmax.f32 %v1439, %v1518
      %v1583 = vmax.f32 %v1441, %v1519
      %v1584 = vmax.f32 %v1443, %v1520
      %v1585 = vmax.f32 %v1447, %v1521
      %v1586 = vmax.f32 %v1449, %v1522
      %v1587 = vmax.f32 %v1451, %v1523
      %v1588 = vmax.f32 %v1453, %v1524
      %v1589 = vmax.f32 %v1457, %v1525
      %v1590 = vmax.f32 %v1459, %v1526
      %v1591 = vmax.f32 %v1461, %v1527
      %v1592 = vmax.f32 %v1463, %v1528
      %v1593 = vld [vmem:[%s5] sm:$0xf]
      %v1595 = vlaneseq
      %v1596 = vshrl.u32 %v1595, 7
      %v1597 = vsub.s32 0, %v1596
      %v1598 = vrot.slane %v1593, %v1597
      %v1599 = vlaneseq
      %v1600 = vshrl.u32 %v1599, 7
      %v1601 = vsub.s32 2, %v1600
      %v1602 = vrot.slane %v1593, %v1601
      %v1605 = vlaneseq
      %v1606 = vshrl.u32 %v1605, 7
      %v1607 = vsub.s32 0, %v1606
      %v1608 = vrot.slane %v1598, %v1607
      %v1609 = vlaneseq
      %v1610 = vshrl.u32 %v1609, 7
      %v1611 = vsub.s32 0, %v1610
      %v1612 = vrot.slane %v1602, %v1611
      %v1613 = vmul.f32 %v1529, %v1608
      %v1614 = vmul.f32 %v1530, %v1612
      %v1615 = vmul.f32 %v1531, %v1608
      %v1616 = vmul.f32 %v1532, %v1612
      %v1617 = vmul.f32 %v1533, %v1608
      %v1618 = vmul.f32 %v1534, %v1612
      %v1619 = vmul.f32 %v1535, %v1608
      %v1620 = vmul.f32 %v1536, %v1612
      %v1621 = vmul.f32 %v1537, %v1608
      %v1622 = vmul.f32 %v1538, %v1612
      %v1623 = vmul.f32 %v1539, %v1608
      %v1624 = vmul.f32 %v1540, %v1612
      %v1625 = vmul.f32 %v1541, %v1608
      %v1626 = vmul.f32 %v1542, %v1612
      %v1627 = vmul.f32 %v1543, %v1608
      %v1628 = vmul.f32 %v1544, %v1612
      %v1629 = vmul.f32 %v1545, %v1608
      %v1630 = vmul.f32 %v1546, %v1612
      %v1631 = vmul.f32 %v1547, %v1608
      %v1632 = vmul.f32 %v1548, %v1612
      %v1633 = vmul.f32 %v1549, %v1608
      %v1634 = vmul.f32 %v1550, %v1612
      %v1635 = vmul.f32 %v1551, %v1608
      %v1636 = vmul.f32 %v1552, %v1612
      %v1637 = vmul.f32 %v1553, %v1608
      %v1638 = vmul.f32 %v1554, %v1612
      %v1639 = vmul.f32 %v1555, %v1608
      %v1640 = vmul.f32 %v1556, %v1612
      %v1641 = vmul.f32 %v1557, %v1608
      %v1642 = vmul.f32 %v1558, %v1612
      %v1643 = vmul.f32 %v1559, %v1608
      %v1644 = vmul.f32 %v1560, %v1612
      %v1645 = vmul.f32 %v1561, %v1608
      %v1646 = vmul.f32 %v1562, %v1612
      %v1647 = vmul.f32 %v1563, %v1608
      %v1648 = vmul.f32 %v1564, %v1612
      %v1649 = vmul.f32 %v1565, %v1608
      %v1650 = vmul.f32 %v1566, %v1612
      %v1651 = vmul.f32 %v1567, %v1608
      %v1652 = vmul.f32 %v1568, %v1612
      %v1653 = vmul.f32 %v1569, %v1608
      %v1654 = vmul.f32 %v1570, %v1612
      %v1655 = vmul.f32 %v1571, %v1608
      %v1656 = vmul.f32 %v1572, %v1612
      %v1657 = vmul.f32 %v1573, %v1608
      %v1658 = vmul.f32 %v1574, %v1612
      %v1659 = vmul.f32 %v1575, %v1608
      %v1660 = vmul.f32 %v1576, %v1612
      %v1661 = vmul.f32 %v1577, %v1608
      %v1662 = vmul.f32 %v1578, %v1612
      %v1663 = vmul.f32 %v1579, %v1608
      %v1664 = vmul.f32 %v1580, %v1612
      %v1665 = vmul.f32 %v1581, %v1608
      %v1666 = vmul.f32 %v1582, %v1612
      %v1667 = vmul.f32 %v1583, %v1608
      %v1668 = vmul.f32 %v1584, %v1612
      %v1669 = vmul.f32 %v1585, %v1608
      %v1670 = vmul.f32 %v1586, %v1612
      %v1671 = vmul.f32 %v1587, %v1608
      %v1672 = vmul.f32 %v1588, %v1612
      %v1673 = vmul.f32 %v1589, %v1608
      %v1674 = vmul.f32 %v1590, %v1612
      %v1675 = vmul.f32 %v1591, %v1608
      %v1676 = vmul.f32 %v1592, %v1612
      %v1677 = vlaneseq
      %v1678 = vshrl.u32 %v1677, 7
      %v1679 = vsub.s32 1, %v1678
      %v1680 = vrot.slane %v1593, %v1679
      %v1681 = vlaneseq
      %v1682 = vshrl.u32 %v1681, 7
      %v1683 = vsub.s32 3, %v1682
      %v1684 = vrot.slane %v1593, %v1683
      %v1687 = vlaneseq
      %v1688 = vshrl.u32 %v1687, 7
      %v1689 = vsub.s32 1, %v1688
      %v1690 = vrot.slane %v1680, %v1689
      %v1691 = vlaneseq
      %v1692 = vshrl.u32 %v1691, 7
      %v1693 = vsub.s32 1, %v1692
      %v1694 = vrot.slane %v1684, %v1693
      %v1695 = vmul.f32 %v1529, %v1690
      %v1696 = vmul.f32 %v1530, %v1694
      %v1697 = vmul.f32 %v1531, %v1690
      %v1698 = vmul.f32 %v1532, %v1694
      %v1699 = vmul.f32 %v1533, %v1690
      %v1700 = vmul.f32 %v1534, %v1694
      %v1701 = vmul.f32 %v1535, %v1690
      %v1702 = vmul.f32 %v1536, %v1694
      %v1703 = vmul.f32 %v1537, %v1690
      %v1704 = vmul.f32 %v1538, %v1694
      %v1705 = vmul.f32 %v1539, %v1690
      %v1706 = vmul.f32 %v1540, %v1694
      %v1707 = vmul.f32 %v1541, %v1690
      %v1708 = vmul.f32 %v1542, %v1694
      %v1709 = vmul.f32 %v1543, %v1690
      %v1710 = vmul.f32 %v1544, %v1694
      %v1711 = vmul.f32 %v1545, %v1690
      %v1712 = vmul.f32 %v1546, %v1694
      %v1713 = vmul.f32 %v1547, %v1690
      %v1714 = vmul.f32 %v1548, %v1694
      %v1715 = vmul.f32 %v1549, %v1690
      %v1716 = vmul.f32 %v1550, %v1694
      %v1717 = vmul.f32 %v1551, %v1690
      %v1718 = vmul.f32 %v1552, %v1694
      %v1719 = vmul.f32 %v1553, %v1690
      %v1720 = vmul.f32 %v1554, %v1694
      %v1721 = vmul.f32 %v1555, %v1690
      %v1722 = vmul.f32 %v1556, %v1694
      %v1723 = vmul.f32 %v1557, %v1690
      %v1724 = vmul.f32 %v1558, %v1694
      %v1725 = vmul.f32 %v1559, %v1690
      %v1726 = vmul.f32 %v1560, %v1694
      %v1727 = vmul.f32 %v1561, %v1690
      %v1728 = vmul.f32 %v1562, %v1694
      %v1729 = vmul.f32 %v1563, %v1690
      %v1730 = vmul.f32 %v1564, %v1694
      %v1731 = vmul.f32 %v1565, %v1690
      %v1732 = vmul.f32 %v1566, %v1694
      %v1733 = vmul.f32 %v1567, %v1690
      %v1734 = vmul.f32 %v1568, %v1694
      %v1735 = vmul.f32 %v1569, %v1690
      %v1736 = vmul.f32 %v1570, %v1694
      %v1737 = vmul.f32 %v1571, %v1690
      %v1738 = vmul.f32 %v1572, %v1694
      %v1739 = vmul.f32 %v1573, %v1690
      %v1740 = vmul.f32 %v1574, %v1694
      %v1741 = vmul.f32 %v1575, %v1690
      %v1742 = vmul.f32 %v1576, %v1694
      %v1743 = vmul.f32 %v1577, %v1690
      %v1744 = vmul.f32 %v1578, %v1694
      %v1745 = vmul.f32 %v1579, %v1690
      %v1746 = vmul.f32 %v1580, %v1694
      %v1747 = vmul.f32 %v1581, %v1690
      %v1748 = vmul.f32 %v1582, %v1694
      %v1749 = vmul.f32 %v1583, %v1690
      %v1750 = vmul.f32 %v1584, %v1694
      %v1751 = vmul.f32 %v1585, %v1690
      %v1752 = vmul.f32 %v1586, %v1694
      %v1753 = vmul.f32 %v1587, %v1690
      %v1754 = vmul.f32 %v1588, %v1694
      %v1755 = vmul.f32 %v1589, %v1690
      %v1756 = vmul.f32 %v1590, %v1694
      %v1757 = vmul.f32 %v1591, %v1690
      %v1758 = vmul.f32 %v1592, %v1694
      %v1759 = vadd.f32 %v1613, %v1614
      %1760 = vadd.xlane.f32.xlu0 %v1759
      %v1761 = vpop.xlane.xlu0 %1760
      %v1762 = vadd.f32 %v1615, %v1616
      %1763 = vadd.xlane.f32.xlu0 %v1762
      %v1764 = vpop.xlane.xlu0 %1763
      %v1765 = vadd.f32 %v1617, %v1618
      %1766 = vadd.xlane.f32.xlu0 %v1765
      %v1767 = vpop.xlane.xlu0 %1766
      %v1768 = vadd.f32 %v1619, %v1620
      %1769 = vadd.xlane.f32.xlu0 %v1768
      %v1770 = vpop.xlane.xlu0 %1769
      %v1771 = vadd.f32 %v1621, %v1622
      %1772 = vadd.xlane.f32.xlu0 %v1771
      %v1773 = vpop.xlane.xlu0 %1772
      %v1774 = vadd.f32 %v1623, %v1624
      %1775 = vadd.xlane.f32.xlu0 %v1774
      %v1776 = vpop.xlane.xlu0 %1775
      %v1777 = vadd.f32 %v1625, %v1626
      %1778 = vadd.xlane.f32.xlu0 %v1777
      %v1779 = vpop.xlane.xlu0 %1778
      %v1780 = vadd.f32 %v1627, %v1628
      %1781 = vadd.xlane.f32.xlu0 %v1780
      %v1782 = vpop.xlane.xlu0 %1781
      %v1783 = vadd.f32 %v1629, %v1630
      %1784 = vadd.xlane.f32.xlu0 %v1783
      %v1785 = vpop.xlane.xlu0 %1784
      %v1786 = vadd.f32 %v1631, %v1632
      %1787 = vadd.xlane.f32.xlu0 %v1786
      %v1788 = vpop.xlane.xlu0 %1787
      %v1789 = vadd.f32 %v1633, %v1634
      %1790 = vadd.xlane.f32.xlu0 %v1789
      %v1791 = vpop.xlane.xlu0 %1790
      %v1792 = vadd.f32 %v1635, %v1636
      %1793 = vadd.xlane.f32.xlu0 %v1792
      %v1794 = vpop.xlane.xlu0 %1793
      %v1795 = vadd.f32 %v1637, %v1638
      %1796 = vadd.xlane.f32.xlu0 %v1795
      %v1797 = vpop.xlane.xlu0 %1796
      %v1798 = vadd.f32 %v1639, %v1640
      %1799 = vadd.xlane.f32.xlu0 %v1798
      %v1800 = vpop.xlane.xlu0 %1799
      %v1801 = vadd.f32 %v1641, %v1642
      %1802 = vadd.xlane.f32.xlu0 %v1801
      %v1803 = vpop.xlane.xlu0 %1802
      %v1804 = vadd.f32 %v1643, %v1644
      %1805 = vadd.xlane.f32.xlu0 %v1804
      %v1806 = vpop.xlane.xlu0 %1805
      %v1807 = vadd.f32 %v1645, %v1646
      %1808 = vadd.xlane.f32.xlu0 %v1807
      %v1809 = vpop.xlane.xlu0 %1808
      %v1810 = vadd.f32 %v1647, %v1648
      %1811 = vadd.xlane.f32.xlu0 %v1810
      %v1812 = vpop.xlane.xlu0 %1811
      %v1813 = vadd.f32 %v1649, %v1650
      %1814 = vadd.xlane.f32.xlu0 %v1813
      %v1815 = vpop.xlane.xlu0 %1814
      %v1816 = vadd.f32 %v1651, %v1652
      %1817 = vadd.xlane.f32.xlu0 %v1816
      %v1818 = vpop.xlane.xlu0 %1817
      %v1819 = vadd.f32 %v1653, %v1654
      %1820 = vadd.xlane.f32.xlu0 %v1819
      %v1821 = vpop.xlane.xlu0 %1820
      %v1822 = vadd.f32 %v1655, %v1656
      %1823 = vadd.xlane.f32.xlu0 %v1822
      %v1824 = vpop.xlane.xlu0 %1823
      %v1825 = vadd.f32 %v1657, %v1658
      %1826 = vadd.xlane.f32.xlu0 %v1825
      %v1827 = vpop.xlane.xlu0 %1826
      %v1828 = vadd.f32 %v1659, %v1660
      %1829 = vadd.xlane.f32.xlu0 %v1828
      %v1830 = vpop.xlane.xlu0 %1829
      %v1831 = vadd.f32 %v1661, %v1662
      %1832 = vadd.xlane.f32.xlu0 %v1831
      %v1833 = vpop.xlane.xlu0 %1832
      %v1834 = vadd.f32 %v1663, %v1664
      %1835 = vadd.xlane.f32.xlu0 %v1834
      %v1836 = vpop.xlane.xlu0 %1835
      %v1837 = vadd.f32 %v1665, %v1666
      %1838 = vadd.xlane.f32.xlu0 %v1837
      %v1839 = vpop.xlane.xlu0 %1838
      %v1840 = vadd.f32 %v1667, %v1668
      %1841 = vadd.xlane.f32.xlu0 %v1840
      %v1842 = vpop.xlane.xlu0 %1841
      %v1843 = vadd.f32 %v1669, %v1670
      %1844 = vadd.xlane.f32.xlu0 %v1843
      %v1845 = vpop.xlane.xlu0 %1844
      %v1846 = vadd.f32 %v1671, %v1672
      %1847 = vadd.xlane.f32.xlu0 %v1846
      %v1848 = vpop.xlane.xlu0 %1847
      %v1849 = vadd.f32 %v1673, %v1674
      %1850 = vadd.xlane.f32.xlu0 %v1849
      %v1851 = vpop.xlane.xlu0 %1850
      %v1852 = vadd.f32 %v1675, %v1676
      %1853 = vadd.xlane.f32.xlu0 %v1852
      %v1854 = vpop.xlane.xlu0 %1853
      %v1855 = vld [vmem:[%s6] sm:$0x1]
      %v1857 = vlaneseq
      %v1858 = vshrl.u32 %v1857, 7
      %v1859 = vsub.s32 0, %v1858
      %v1860 = vrot.slane %v1855, %v1859
      %v1862 = vadd.f32 %v1761, %v1860
      %v1863 = vadd.f32 %v1764, %v1860
      %v1864 = vadd.f32 %v1767, %v1860
      %v1865 = vadd.f32 %v1770, %v1860
      %v1866 = vadd.f32 %v1773, %v1860
      %v1867 = vadd.f32 %v1776, %v1860
      %v1868 = vadd.f32 %v1779, %v1860
      %v1869 = vadd.f32 %v1782, %v1860
      %v1870 = vadd.f32 %v1785, %v1860
      %v1871 = vadd.f32 %v1788, %v1860
      %v1872 = vadd.f32 %v1791, %v1860
      %v1873 = vadd.f32 %v1794, %v1860
      %v1874 = vadd.f32 %v1797, %v1860
      %v1875 = vadd.f32 %v1800, %v1860
      %v1876 = vadd.f32 %v1803, %v1860
      %v1877 = vadd.f32 %v1806, %v1860
      %v1878 = vadd.f32 %v1809, %v1860
      %v1879 = vadd.f32 %v1812, %v1860
      %v1880 = vadd.f32 %v1815, %v1860
      %v1881 = vadd.f32 %v1818, %v1860
      %v1882 = vadd.f32 %v1821, %v1860
      %v1883 = vadd.f32 %v1824, %v1860
      %v1884 = vadd.f32 %v1827, %v1860
      %v1885 = vadd.f32 %v1830, %v1860
      %v1886 = vadd.f32 %v1833, %v1860
      %v1887 = vadd.f32 %v1836, %v1860
      %v1888 = vadd.f32 %v1839, %v1860
      %v1889 = vadd.f32 %v1842, %v1860
      %v1890 = vadd.f32 %v1845, %v1860
      %v1891 = vadd.f32 %v1848, %v1860
      %v1892 = vadd.f32 %v1851, %v1860
      %v1893 = vadd.f32 %v1854, %v1860
      %v1894 = vadd.f32 %v1695, %v1696
      %1895 = vadd.xlane.f32.xlu0 %v1894
      %v1896 = vpop.xlane.xlu0 %1895
      %v1897 = vadd.f32 %v1697, %v1698
      %1898 = vadd.xlane.f32.xlu0 %v1897
      %v1899 = vpop.xlane.xlu0 %1898
      %v1900 = vadd.f32 %v1699, %v1700
      %1901 = vadd.xlane.f32.xlu0 %v1900
      %v1902 = vpop.xlane.xlu0 %1901
      %v1903 = vadd.f32 %v1701, %v1702
      %1904 = vadd.xlane.f32.xlu0 %v1903
      %v1905 = vpop.xlane.xlu0 %1904
      %v1906 = vadd.f32 %v1703, %v1704
      %1907 = vadd.xlane.f32.xlu0 %v1906
      %v1908 = vpop.xlane.xlu0 %1907
      %v1909 = vadd.f32 %v1705, %v1706
      %1910 = vadd.xlane.f32.xlu0 %v1909
      %v1911 = vpop.xlane.xlu0 %1910
      %v1912 = vadd.f32 %v1707, %v1708
      %1913 = vadd.xlane.f32.xlu0 %v1912
      %v1914 = vpop.xlane.xlu0 %1913
      %v1915 = vadd.f32 %v1709, %v1710
      %1916 = vadd.xlane.f32.xlu0 %v1915
      %v1917 = vpop.xlane.xlu0 %1916
      %v1918 = vadd.f32 %v1711, %v1712
      %1919 = vadd.xlane.f32.xlu0 %v1918
      %v1920 = vpop.xlane.xlu0 %1919
      %v1921 = vadd.f32 %v1713, %v1714
      %1922 = vadd.xlane.f32.xlu0 %v1921
      %v1923 = vpop.xlane.xlu0 %1922
      %v1924 = vadd.f32 %v1715, %v1716
      %1925 = vadd.xlane.f32.xlu0 %v1924
      %v1926 = vpop.xlane.xlu0 %1925
      %v1927 = vadd.f32 %v1717, %v1718
      %1928 = vadd.xlane.f32.xlu0 %v1927
      %v1929 = vpop.xlane.xlu0 %1928
      %v1930 = vadd.f32 %v1719, %v1720
      %1931 = vadd.xlane.f32.xlu0 %v1930
      %v1932 = vpop.xlane.xlu0 %1931
      %v1933 = vadd.f32 %v1721, %v1722
      %1934 = vadd.xlane.f32.xlu0 %v1933
      %v1935 = vpop.xlane.xlu0 %1934
      %v1936 = vadd.f32 %v1723, %v1724
      %1937 = vadd.xlane.f32.xlu0 %v1936
      %v1938 = vpop.xlane.xlu0 %1937
      %v1939 = vadd.f32 %v1725, %v1726
      %1940 = vadd.xlane.f32.xlu0 %v1939
      %v1941 = vpop.xlane.xlu0 %1940
      %v1942 = vadd.f32 %v1727, %v1728
      %1943 = vadd.xlane.f32.xlu0 %v1942
      %v1944 = vpop.xlane.xlu0 %1943
      %v1945 = vadd.f32 %v1729, %v1730
      %1946 = vadd.xlane.f32.xlu0 %v1945
      %v1947 = vpop.xlane.xlu0 %1946
      %v1948 = vadd.f32 %v1731, %v1732
      %1949 = vadd.xlane.f32.xlu0 %v1948
      %v1950 = vpop.xlane.xlu0 %1949
      %v1951 = vadd.f32 %v1733, %v1734
      %1952 = vadd.xlane.f32.xlu0 %v1951
      %v1953 = vpop.xlane.xlu0 %1952
      %v1954 = vadd.f32 %v1735, %v1736
      %1955 = vadd.xlane.f32.xlu0 %v1954
      %v1956 = vpop.xlane.xlu0 %1955
      %v1957 = vadd.f32 %v1737, %v1738
      %1958 = vadd.xlane.f32.xlu0 %v1957
      %v1959 = vpop.xlane.xlu0 %1958
      %v1960 = vadd.f32 %v1739, %v1740
      %1961 = vadd.xlane.f32.xlu0 %v1960
      %v1962 = vpop.xlane.xlu0 %1961
      %v1963 = vadd.f32 %v1741, %v1742
      %1964 = vadd.xlane.f32.xlu0 %v1963
      %v1965 = vpop.xlane.xlu0 %1964
      %v1966 = vadd.f32 %v1743, %v1744
      %1967 = vadd.xlane.f32.xlu0 %v1966
      %v1968 = vpop.xlane.xlu0 %1967
      %v1969 = vadd.f32 %v1745, %v1746
      %1970 = vadd.xlane.f32.xlu0 %v1969
      %v1971 = vpop.xlane.xlu0 %1970
      %v1972 = vadd.f32 %v1747, %v1748
      %1973 = vadd.xlane.f32.xlu0 %v1972
      %v1974 = vpop.xlane.xlu0 %1973
      %v1975 = vadd.f32 %v1749, %v1750
      %1976 = vadd.xlane.f32.xlu0 %v1975
      %v1977 = vpop.xlane.xlu0 %1976
      %v1978 = vadd.f32 %v1751, %v1752
      %1979 = vadd.xlane.f32.xlu0 %v1978
      %v1980 = vpop.xlane.xlu0 %1979
      %v1981 = vadd.f32 %v1753, %v1754
      %1982 = vadd.xlane.f32.xlu0 %v1981
      %v1983 = vpop.xlane.xlu0 %1982
      %v1984 = vadd.f32 %v1755, %v1756
      %1985 = vadd.xlane.f32.xlu0 %v1984
      %v1986 = vpop.xlane.xlu0 %1985
      %v1987 = vadd.f32 %v1757, %v1758
      %1988 = vadd.xlane.f32.xlu0 %v1987
      %v1989 = vpop.xlane.xlu0 %1988
      %v1990 = vadd.f32 %v1896, %v1860
      %v1991 = vadd.f32 %v1899, %v1860
      %v1992 = vadd.f32 %v1902, %v1860
      %v1993 = vadd.f32 %v1905, %v1860
      %v1994 = vadd.f32 %v1908, %v1860
      %v1995 = vadd.f32 %v1911, %v1860
      %v1996 = vadd.f32 %v1914, %v1860
      %v1997 = vadd.f32 %v1917, %v1860
      %v1998 = vadd.f32 %v1920, %v1860
      %v1999 = vadd.f32 %v1923, %v1860
      %v2000 = vadd.f32 %v1926, %v1860
      %v2001 = vadd.f32 %v1929, %v1860
      %v2002 = vadd.f32 %v1932, %v1860
      %v2003 = vadd.f32 %v1935, %v1860
      %v2004 = vadd.f32 %v1938, %v1860
      %v2005 = vadd.f32 %v1941, %v1860
      %v2006 = vadd.f32 %v1944, %v1860
      %v2007 = vadd.f32 %v1947, %v1860
      %v2008 = vadd.f32 %v1950, %v1860
      %v2009 = vadd.f32 %v1953, %v1860
      %v2010 = vadd.f32 %v1956, %v1860
      %v2011 = vadd.f32 %v1959, %v1860
      %v2012 = vadd.f32 %v1962, %v1860
      %v2013 = vadd.f32 %v1965, %v1860
      %v2014 = vadd.f32 %v1968, %v1860
      %v2015 = vadd.f32 %v1971, %v1860
      %v2016 = vadd.f32 %v1974, %v1860
      %v2017 = vadd.f32 %v1977, %v1860
      %v2018 = vadd.f32 %v1980, %v1860
      %v2019 = vadd.f32 %v1983, %v1860
      %v2020 = vadd.f32 %v1986, %v1860
      %v2021 = vadd.f32 %v1989, %v1860
      %v2022 = vtanh.pop %v1862
      %v2023 = vtanh.pop %v1863
      %v2024 = vtanh.pop %v1864
      %v2025 = vtanh.pop %v1865
      %v2026 = vtanh.pop %v1866
      %v2027 = vtanh.pop %v1867
      %v2028 = vtanh.pop %v1868
      %v2029 = vtanh.pop %v1869
      %v2030 = vtanh.pop %v1870
      %v2031 = vtanh.pop %v1871
      %v2032 = vtanh.pop %v1872
      %v2033 = vtanh.pop %v1873
      %v2034 = vtanh.pop %v1874
      %v2035 = vtanh.pop %v1875
      %v2036 = vtanh.pop %v1876
      %v2037 = vtanh.pop %v1877
      %v2038 = vtanh.pop %v1878
      %v2039 = vtanh.pop %v1879
      %v2040 = vtanh.pop %v1880
      %v2041 = vtanh.pop %v1881
      %v2042 = vtanh.pop %v1882
      %v2043 = vtanh.pop %v1883
      %v2044 = vtanh.pop %v1884
      %v2045 = vtanh.pop %v1885
      %v2046 = vtanh.pop %v1886
      %v2047 = vtanh.pop %v1887
      %v2048 = vtanh.pop %v1888
      %v2049 = vtanh.pop %v1889
      %v2050 = vtanh.pop %v1890
      %v2051 = vtanh.pop %v1891
      %v2052 = vtanh.pop %v1892
      %v2053 = vtanh.pop %v1893
      %vm2054 = vcmask 7168
      %2055 = vst.msk [vmem:[%s280] sm:$0xff] %vm2054, %v2022
      %2056 = vst.msk [vmem:[%s280 + $0x8] sm:$0xff] %vm2054, %v2023
      %2057 = vst.msk [vmem:[%s280 + $0x10] sm:$0xff] %vm2054, %v2024
      %2058 = vst.msk [vmem:[%s280 + $0x18] sm:$0xff] %vm2054, %v2025
      %2059 = vst.msk [vmem:[%s280 + $0x20] sm:$0xff] %vm2054, %v2026
      %2060 = vst.msk [vmem:[%s280 + $0x28] sm:$0xff] %vm2054, %v2027
      %2061 = vst.msk [vmem:[%s280 + $0x30] sm:$0xff] %vm2054, %v2028
      %2062 = vst.msk [vmem:[%s280 + $0x38] sm:$0xff] %vm2054, %v2029
      %2063 = vst.msk [vmem:[%s280 + $0x40] sm:$0xff] %vm2054, %v2030
      %2064 = vst.msk [vmem:[%s280 + $0x48] sm:$0xff] %vm2054, %v2031
      %2065 = vst.msk [vmem:[%s280 + $0x50] sm:$0xff] %vm2054, %v2032
      %2066 = vst.msk [vmem:[%s280 + $0x58] sm:$0xff] %vm2054, %v2033
      %2067 = vst.msk [vmem:[%s280 + $0x60] sm:$0xff] %vm2054, %v2034
      %2068 = vst.msk [vmem:[%s280 + $0x68] sm:$0xff] %vm2054, %v2035
      %2069 = vst.msk [vmem:[%s280 + $0x70] sm:$0xff] %vm2054, %v2036
      %2070 = vst.msk [vmem:[%s280 + $0x78] sm:$0xff] %vm2054, %v2037
      %2071 = vst.msk [vmem:[%s280 + $0x80] sm:$0xff] %vm2054, %v2038
      %2072 = vst.msk [vmem:[%s280 + $0x88] sm:$0xff] %vm2054, %v2039
      %2073 = vst.msk [vmem:[%s280 + $0x90] sm:$0xff] %vm2054, %v2040
      %2074 = vst.msk [vmem:[%s280 + $0x98] sm:$0xff] %vm2054, %v2041
      %2075 = vst.msk [vmem:[%s280 + $0xa0] sm:$0xff] %vm2054, %v2042
      %2076 = vst.msk [vmem:[%s280 + $0xa8] sm:$0xff] %vm2054, %v2043
      %2077 = vst.msk [vmem:[%s280 + $0xb0] sm:$0xff] %vm2054, %v2044
      %2078 = vst.msk [vmem:[%s280 + $0xb8] sm:$0xff] %vm2054, %v2045
      %2079 = vst.msk [vmem:[%s280 + $0xc0] sm:$0xff] %vm2054, %v2046
      %2080 = vst.msk [vmem:[%s280 + $0xc8] sm:$0xff] %vm2054, %v2047
      %2081 = vst.msk [vmem:[%s280 + $0xd0] sm:$0xff] %vm2054, %v2048
      %2082 = vst.msk [vmem:[%s280 + $0xd8] sm:$0xff] %vm2054, %v2049
      %2083 = vst.msk [vmem:[%s280 + $0xe0] sm:$0xff] %vm2054, %v2050
      %2084 = vst.msk [vmem:[%s280 + $0xe8] sm:$0xff] %vm2054, %v2051
      %2085 = vst.msk [vmem:[%s280 + $0xf0] sm:$0xff] %vm2054, %v2052
      %2086 = vst.msk [vmem:[%s280 + $0xf8] sm:$0xff] %vm2054, %v2053
      %v2087 = vtanh.pop %v1990
      %v2088 = vtanh.pop %v1991
      %v2089 = vtanh.pop %v1992
      %v2090 = vtanh.pop %v1993
      %v2091 = vtanh.pop %v1994
      %v2092 = vtanh.pop %v1995
      %v2093 = vtanh.pop %v1996
      %v2094 = vtanh.pop %v1997
      %v2095 = vtanh.pop %v1998
      %v2096 = vtanh.pop %v1999
      %v2097 = vtanh.pop %v2000
      %v2098 = vtanh.pop %v2001
      %v2099 = vtanh.pop %v2002
      %v2100 = vtanh.pop %v2003
      %v2101 = vtanh.pop %v2004
      %v2102 = vtanh.pop %v2005
      %v2103 = vtanh.pop %v2006
      %v2104 = vtanh.pop %v2007
      %v2105 = vtanh.pop %v2008
      %v2106 = vtanh.pop %v2009
      %v2107 = vtanh.pop %v2010
      %v2108 = vtanh.pop %v2011
      %v2109 = vtanh.pop %v2012
      %v2110 = vtanh.pop %v2013
      %v2111 = vtanh.pop %v2014
      %v2112 = vtanh.pop %v2015
      %v2113 = vtanh.pop %v2016
      %v2114 = vtanh.pop %v2017
      %v2115 = vtanh.pop %v2018
      %v2116 = vtanh.pop %v2019
      %v2117 = vtanh.pop %v2020
      %v2118 = vtanh.pop %v2021
      %vm2119 = vcmask 15368
      %2120 = vst.msk [vmem:[%s280] sm:$0xff] %vm2119, %v2087
      %2121 = vst.msk [vmem:[%s280 + $0x8] sm:$0xff] %vm2119, %v2088
      %2122 = vst.msk [vmem:[%s280 + $0x10] sm:$0xff] %vm2119, %v2089
      %2123 = vst.msk [vmem:[%s280 + $0x18] sm:$0xff] %vm2119, %v2090
      %2124 = vst.msk [vmem:[%s280 + $0x20] sm:$0xff] %vm2119, %v2091
      %2125 = vst.msk [vmem:[%s280 + $0x28] sm:$0xff] %vm2119, %v2092
      %2126 = vst.msk [vmem:[%s280 + $0x30] sm:$0xff] %vm2119, %v2093
      %2127 = vst.msk [vmem:[%s280 + $0x38] sm:$0xff] %vm2119, %v2094
      %2128 = vst.msk [vmem:[%s280 + $0x40] sm:$0xff] %vm2119, %v2095
      %2129 = vst.msk [vmem:[%s280 + $0x48] sm:$0xff] %vm2119, %v2096
      %2130 = vst.msk [vmem:[%s280 + $0x50] sm:$0xff] %vm2119, %v2097
      %2131 = vst.msk [vmem:[%s280 + $0x58] sm:$0xff] %vm2119, %v2098
      %2132 = vst.msk [vmem:[%s280 + $0x60] sm:$0xff] %vm2119, %v2099
      %2133 = vst.msk [vmem:[%s280 + $0x68] sm:$0xff] %vm2119, %v2100
      %2134 = vst.msk [vmem:[%s280 + $0x70] sm:$0xff] %vm2119, %v2101
      %2135 = vst.msk [vmem:[%s280 + $0x78] sm:$0xff] %vm2119, %v2102
      %2136 = vst.msk [vmem:[%s280 + $0x80] sm:$0xff] %vm2119, %v2103
      %2137 = vst.msk [vmem:[%s280 + $0x88] sm:$0xff] %vm2119, %v2104
      %2138 = vst.msk [vmem:[%s280 + $0x90] sm:$0xff] %vm2119, %v2105
      %2139 = vst.msk [vmem:[%s280 + $0x98] sm:$0xff] %vm2119, %v2106
      %2140 = vst.msk [vmem:[%s280 + $0xa0] sm:$0xff] %vm2119, %v2107
      %2141 = vst.msk [vmem:[%s280 + $0xa8] sm:$0xff] %vm2119, %v2108
      %2142 = vst.msk [vmem:[%s280 + $0xb0] sm:$0xff] %vm2119, %v2109
      %2143 = vst.msk [vmem:[%s280 + $0xb8] sm:$0xff] %vm2119, %v2110
      %2144 = vst.msk [vmem:[%s280 + $0xc0] sm:$0xff] %vm2119, %v2111
      %2145 = vst.msk [vmem:[%s280 + $0xc8] sm:$0xff] %vm2119, %v2112
      %2146 = vst.msk [vmem:[%s280 + $0xd0] sm:$0xff] %vm2119, %v2113
      %2147 = vst.msk [vmem:[%s280 + $0xd8] sm:$0xff] %vm2119, %v2114
      %2148 = vst.msk [vmem:[%s280 + $0xe0] sm:$0xff] %vm2119, %v2115
      %2149 = vst.msk [vmem:[%s280 + $0xe8] sm:$0xff] %vm2119, %v2116
      %2150 = vst.msk [vmem:[%s280 + $0xf0] sm:$0xff] %vm2119, %v2117
      %2151 = vst.msk [vmem:[%s280 + $0xf8] sm:$0xff] %vm2119, %v2118
      %s2152 = smul.u32 32, %s18
      %p2153 = scmp.lt.s32.totalorder %s2152, 63
      %s2154 = scalar_select %p2153, %s2152, 63
      %s2155 = smul.addr %s2154, 8
      %s2156 = scalar_lea.vmem %s7, %s2155
      // Predicated region
      $region49: #{generator_forward.1} parent=47 // pred_check
        %p2157 = pneg %p188
      $region50: #{generator_forward.1} parent=47 // pred_check_branch
        %2159 = sbr.rel (%p2157) target = $region52
      $region51: #{generator_forward.1} parent=47 // pred_region
        %s2160 = smul.u32 32, %s18
      $region52: #{generator_forward.1} parent=47 // pred_fallthru
        _
    $region48: #{generator_forward.1} parent=5 // pred_fallthru
      _
    %p2161 = scmp.le.s32.totalorder 2, %s13
    // Predicated region
    $region53: #{generator_forward.1} parent=5 // pred_check
      %p2162 = pneg %p2161
    $region54: #{generator_forward.1} parent=5 // pred_check_branch
      %2164 = sbr.rel (%p2162) target = $region56
    $region55: #{generator_forward.1} parent=5 // pred_region
      %s2165 = ssub.s32 %s13, 2
      // Predicated region
      $region57: #{generator_forward.1} parent=55 // pred_check
        %p2166 = pneg %p194
      $region58: #{generator_forward.1} parent=55 // pred_check_branch
        %2168 = sbr.rel (%p2166) target = $region60
      $region59: #{generator_forward.1} parent=55 // pred_region
        %s2169 = smul.u32 32, %s19
        %p2170 = scmp.lt.s32.totalorder %s2169, 63
        %s2171 = scalar_select %p2170, %s2169, 63
        %s2172 = smul.addr %s2171, 8
        %s2173 = scalar_lea.vmem %s7, %s2172
      $region60: #{generator_forward.1} parent=55 // pred_fallthru
        _
    $region56: #{generator_forward.1} parent=5 // pred_fallthru
      _
  $region6: #{generator_forward.1} parent=0 // loop_footer
    %s17 = sadd.s32 1, %s13
  $region7: #{generator_forward.1} parent=0 // loop_footer_branch
    %12 = sbr.rel target = $region3
  $region8: #{generator_forward.1} parent=0 // loop_exit
    _

</llo_original>
